<compile_context>
chip_gen: v7x
topology: tpu7x:2x2x1
jax: 0.10.0
libtpu: 0.0.40
codegen_flags: <defaults>
</compile_context>

<pallas_src>
import math

import jax
import jax.numpy as jnp
from jax import lax
from jax.experimental import pallas as pl
from jax.experimental.pallas import tpu as pltpu

# Model hyperparameters (small, deterministic synthetic config)
B = 2          # batch
S = 8          # sequence length
D = 32         # d_model
H = 4          # num_heads
DK = D // H    # per-head dim
F = 64         # d_ff
BS = B * S     # flattened rows
EPS = 1e-5


def encoder_layer_kernel(x_ref, wqkv_ref, wo_ref, w1_ref, w2_ref, vec_ref, o_ref):
    # x_ref: (B*S, D) f32 -- whole problem lives in VMEM, one invocation.
    x = x_ref[...]

    # Packed small vectors: one (8, 3D) VMEM tile.
    vecs = vec_ref[...]
    bqkv = vecs[0:1, :]          # (1, 3D)
    bo   = vecs[1:2, :D]
    g1   = vecs[2:3, :D]
    be1  = vecs[3:4, :D]
    bf1  = vecs[4:5, :F]
    bf2  = vecs[5:6, :D]
    g2   = vecs[6:7, :D]
    be2  = vecs[7:8, :D]

    # --- fused QKV projection: single MXU pass ---------------------------
    qkv = jnp.dot(x, wqkv_ref[...], preferred_element_type=jnp.float32) + bqkv  # (BS, 3D)

    scale = 1.0 / math.sqrt(DK)

    # --- multi-head self-attention ---------------------------------------
    # Static unroll over batch (sublane-aligned 8-row slabs) and heads.
    # K is transposed ONCE per batch; per-head K slices are then sublane
    # slices (free). Per-head contexts are lane-concatenated and pushed
    # through Wo with a single MXU pass.
    ctx_rows = []
    for b in range(B):
        qkv_b = qkv[b * S:(b + 1) * S, :]                 # (S, 3D) sublane slab
        kT_b = qkv_b[:, D:2 * D].T                        # (D, S)  one transpose / batch
        ctx_heads = []
        for h in range(H):
            qh  = qkv_b[:, h * DK:(h + 1) * DK]                   # (S, DK)
            kTh = kT_b[h * DK:(h + 1) * DK, :]                    # (DK, S) sublane slice
            vh  = qkv_b[:, 2 * D + h * DK:2 * D + (h + 1) * DK]   # (S, DK)

            s = jnp.dot(qh, kTh, preferred_element_type=jnp.float32) * scale  # (S, S)
            s = s - jnp.max(s, axis=-1, keepdims=True)
            p = jnp.exp(s)
            inv = pl.reciprocal(jnp.sum(p, axis=-1, keepdims=True))   # exact 1/x
            ctx_heads.append(
                jnp.dot(p * inv, vh, preferred_element_type=jnp.float32))  # (S, DK)
        ctx_rows.append(jnp.concatenate(ctx_heads, axis=-1))     # (S, D) lane concat
    ctx = jnp.concatenate(ctx_rows, axis=0)                      # (BS, D) sublane concat

    # Single output projection for all batches/heads.
    attn = jnp.dot(ctx, wo_ref[...], preferred_element_type=jnp.float32) + bo

    # --- residual + LayerNorm1 (independent E[x], E[x^2] reductions) -----
    y = x + attn
    mu = jnp.mean(y, axis=-1, keepdims=True)
    msq = jnp.mean(y * y, axis=-1, keepdims=True)
    var = msq - mu * mu
    y = (y - mu) * lax.rsqrt(var + EPS) * g1 + be1

    # --- feed-forward: Linear -> ReLU -> Linear --------------------------
    h1 = jnp.maximum(
        jnp.dot(y, w1_ref[...], preferred_element_type=jnp.float32) + bf1, 0.0)
    ff = jnp.dot(h1, w2_ref[...], preferred_element_type=jnp.float32) + bf2

    # --- residual + LayerNorm2 --------------------------------------------
    z = y + ff
    mu2 = jnp.mean(z, axis=-1, keepdims=True)
    msq2 = jnp.mean(z * z, axis=-1, keepdims=True)
    var2 = msq2 - mu2 * mu2
    o_ref[...] = ((z - mu2) * lax.rsqrt(var2 + EPS) * g2 + be2).astype(o_ref.dtype)


def pack_params(params):
    """One-time host-side packing (runs at parameter-init time, NOT per call)."""
    wqkv = jnp.concatenate([params["wq"], params["wk"], params["wv"]], axis=1)  # (D, 3D)
    bqkv = jnp.concatenate(
        [params["bq"], params["bk"], params["bv"]], axis=-1).reshape(-1)        # (3D,)

    vecs = jnp.zeros((8, 3 * D), jnp.float32)
    vecs = vecs.at[0, :3 * D].set(bqkv)
    vecs = vecs.at[1, :D].set(params["bo"].reshape(-1))
    vecs = vecs.at[2, :D].set(params["g1"].reshape(-1))
    vecs = vecs.at[3, :D].set(params["be1"].reshape(-1))
    vecs = vecs.at[4, :F].set(params["bf1"].reshape(-1))
    vecs = vecs.at[5, :D].set(params["bf2"].reshape(-1))
    vecs = vecs.at[6, :D].set(params["g2"].reshape(-1))
    vecs = vecs.at[7, :D].set(params["be2"].reshape(-1))

    return {
        "wqkv": wqkv,
        "wo": params["wo"],
        "w1": params["w1"],
        "w2": params["w2"],
        "vecs": vecs,
    }


@jax.jit
def encoder_layer(x, wqkv, wo, w1, w2, vecs):
    """x: (B, S, D) float32. Weights arrive pre-packed; jitted path is just the kernel."""
    x_flat = x.reshape(BS, D)   # fold batch into rows (last dim unchanged, free)

    out_flat = pl.pallas_call(
        encoder_layer_kernel,
        out_shape=jax.ShapeDtypeStruct((BS, D), jnp.float32),
        in_specs=[pl.BlockSpec(memory_space=pltpu.MemorySpace.VMEM)] * 6,
        out_specs=pl.BlockSpec(memory_space=pltpu.MemorySpace.VMEM),
    )(x_flat, wqkv, wo, w1, w2, vecs)

    return out_flat.reshape(B, S, D)


def reference(x, p):
    """Pure-JAX reference of the same forward pass (eval mode, no mask)."""
    q = x @ p["wq"] + p["bq"]
    k = x @ p["wk"] + p["bk"]
    v = x @ p["wv"] + p["bv"]
    qh = q.reshape(B, S, H, DK).transpose(0, 2, 1, 3)
    kh = k.reshape(B, S, H, DK).transpose(0, 2, 1, 3)
    vh = v.reshape(B, S, H, DK).transpose(0, 2, 1, 3)
    s = jnp.einsum("bhqd,bhkd->bhqk", qh, kh) / math.sqrt(DK)
    p_attn = jax.nn.softmax(s, axis=-1)
    o = jnp.einsum("bhqk,bhkd->bhqd", p_attn, vh)
    o = o.transpose(0, 2, 1, 3).reshape(B, S, D)
    attn = o @ p["wo"] + p["bo"]

    def ln(y, g, b):
        mu = jnp.mean(y, axis=-1, keepdims=True)
        var = jnp.mean((y - mu) ** 2, axis=-1, keepdims=True)
        return (y - mu) * jax.lax.rsqrt(var + EPS) * g + b

    y = ln(x + attn, p["g1"], p["be1"])
    ff = jnp.maximum(y @ p["w1"] + p["bf1"], 0.0) @ p["w2"] + p["bf2"]
    return ln(y + ff, p["g2"], p["be2"])


if __name__ == "__main__":
    key = jax.random.PRNGKey(0)
    keys = jax.random.split(key, 16)

    def winit(k, shape, fan_in):
        return jax.random.normal(k, shape, jnp.float32) / math.sqrt(fan_in)

    params = {
        "wq": winit(keys[0], (D, D), D), "bq": winit(keys[1], (1, D), D),
        "wk": winit(keys[2], (D, D), D), "bk": winit(keys[3], (1, D), D),
        "wv": winit(keys[4], (D, D), D), "bv": winit(keys[5], (1, D), D),
        "wo": winit(keys[6], (D, D), D), "bo": winit(keys[7], (1, D), D),
        "g1": jnp.ones((1, D), jnp.float32), "be1": jnp.zeros((1, D), jnp.float32),
        "w1": winit(keys[8], (D, F), D), "bf1": winit(keys[9], (1, F), D),
        "w2": winit(keys[10], (F, D), F), "bf2": winit(keys[11], (1, D), F),
        "g2": jnp.ones((1, D), jnp.float32), "be2": jnp.zeros((1, D), jnp.float32),
    }

    # One-time packing outside the per-call jitted path.
    packed = jax.tree_util.tree_map(jax.block_until_ready, pack_params(params))

    x = jax.random.normal(keys[12], (B, S, D), jnp.float32)

    out = jax.block_until_ready(
        encoder_layer(x, packed["wqkv"], packed["wo"], packed["w1"],
                      packed["w2"], packed["vecs"]))
    ref = reference(x, params)

    assert out.shape == (B, S, D)
    assert jnp.allclose(out, ref, atol=2e-5, rtol=2e-5), (
        float(jnp.max(jnp.abs(out - ref))))

    print("KERNEL_OK")
</pallas_src>

<mosaic_0001>
module attributes {stable_mosaic.version = 11 : i64} {
  func.func @encoder_layer_kernel(%arg0: memref<16x32xf32, #tpu.memory_space<vmem>>, %arg1: memref<32x96xf32, #tpu.memory_space<vmem>>, %arg2: memref<32x32xf32, #tpu.memory_space<vmem>>, %arg3: memref<32x64xf32, #tpu.memory_space<vmem>>, %arg4: memref<64x32xf32, #tpu.memory_space<vmem>>, %arg5: memref<8x96xf32, #tpu.memory_space<vmem>>, %arg6: memref<16x32xf32, #tpu.memory_space<vmem>>) attributes {dimension_semantics = [], scalar_prefetch = 0 : i64, scratch_operands = 0 : i64, tpu.core_type = #tpu.core_type<tc>} {
    %c0 = arith.constant 0 : index
    %c0_0 = arith.constant 0 : index
    %0 = vector.load %arg0[%c0, %c0_0] : memref<16x32xf32, #tpu.memory_space<vmem>>, vector<16x32xf32>
    %c0_1 = arith.constant 0 : index
    %c0_2 = arith.constant 0 : index
    %1 = vector.load %arg5[%c0_1, %c0_2] : memref<8x96xf32, #tpu.memory_space<vmem>>, vector<8x96xf32>
    %2 = vector.extract_strided_slice %1 {offsets = [0, 0], sizes = [1, 96], strides = [1, 1]} : vector<8x96xf32> to vector<1x96xf32>
    %3 = vector.extract_strided_slice %1 {offsets = [1, 0], sizes = [1, 32], strides = [1, 1]} : vector<8x96xf32> to vector<1x32xf32>
    %4 = vector.extract_strided_slice %1 {offsets = [2, 0], sizes = [1, 32], strides = [1, 1]} : vector<8x96xf32> to vector<1x32xf32>
    %5 = vector.extract_strided_slice %1 {offsets = [3, 0], sizes = [1, 32], strides = [1, 1]} : vector<8x96xf32> to vector<1x32xf32>
    %6 = vector.extract_strided_slice %1 {offsets = [4, 0], sizes = [1, 64], strides = [1, 1]} : vector<8x96xf32> to vector<1x64xf32>
    %7 = vector.extract_strided_slice %1 {offsets = [5, 0], sizes = [1, 32], strides = [1, 1]} : vector<8x96xf32> to vector<1x32xf32>
    %8 = vector.extract_strided_slice %1 {offsets = [6, 0], sizes = [1, 32], strides = [1, 1]} : vector<8x96xf32> to vector<1x32xf32>
    %9 = vector.extract_strided_slice %1 {offsets = [7, 0], sizes = [1, 32], strides = [1, 1]} : vector<8x96xf32> to vector<1x32xf32>
    %c0_3 = arith.constant 0 : index
    %c0_4 = arith.constant 0 : index
    %10 = vector.load %arg1[%c0_3, %c0_4] : memref<32x96xf32, #tpu.memory_space<vmem>>, vector<32x96xf32>
    %cst = arith.constant dense<0.000000e+00> : vector<16x96xf32>
    %11 = tpu.matmul %0, %10, %cst {dimension_numbers = #tpu.dot_dimension_numbers<[1], [0], [0], [1], [0, 0, 1, 1], [], []>} : vector<16x32xf32>, vector<32x96xf32>, vector<16x96xf32> -> vector<16x96xf32>
    %12 = vector.broadcast %2 : vector<1x96xf32> to vector<16x96xf32>
    %13 = arith.addf %11, %12 : vector<16x96xf32>
    %14 = vector.extract_strided_slice %13 {offsets = [0, 0], sizes = [8, 96], strides = [1, 1]} : vector<16x96xf32> to vector<8x96xf32>
    %15 = vector.extract_strided_slice %14 {offsets = [0, 32], sizes = [8, 32], strides = [1, 1]} : vector<8x96xf32> to vector<8x32xf32>
    %16 = tpu.transpose %15, [1, 0] : vector<8x32xf32> -> vector<32x8xf32>
    %17 = vector.extract_strided_slice %14 {offsets = [0, 0], sizes = [8, 8], strides = [1, 1]} : vector<8x96xf32> to vector<8x8xf32>
    %18 = vector.extract_strided_slice %16 {offsets = [0, 0], sizes = [8, 8], strides = [1, 1]} : vector<32x8xf32> to vector<8x8xf32>
    %19 = vector.extract_strided_slice %14 {offsets = [0, 64], sizes = [8, 8], strides = [1, 1]} : vector<8x96xf32> to vector<8x8xf32>
    %cst_5 = arith.constant dense<0.000000e+00> : vector<8x8xf32>
    %20 = tpu.matmul %17, %18, %cst_5 {dimension_numbers = #tpu.dot_dimension_numbers<[1], [0], [0], [1], [0, 0, 1, 1], [], []>} : vector<8x8xf32>, vector<8x8xf32>, vector<8x8xf32> -> vector<8x8xf32>
    %cst_6 = arith.constant 0.353553385 : f32
    %21 = vector.broadcast %cst_6 : f32 to vector<8x8xf32>
    %22 = arith.mulf %20, %21 : vector<8x8xf32>
    %cst_7 = arith.constant dense<0xFF800000> : vector<8xf32>
    %23 = vector.multi_reduction <maximumf>, %22, %cst_7 [1] : vector<8x8xf32> to vector<8xf32>
    %24 = vector.shape_cast %23 : vector<8xf32> to vector<8x1xf32>
    %25 = vector.broadcast %24 : vector<8x1xf32> to vector<8x8xf32>
    %26 = arith.subf %22, %25 : vector<8x8xf32>
    %27 = math.exp %26 : vector<8x8xf32>
    %cst_8 = arith.constant dense<0.000000e+00> : vector<8xf32>
    %28 = vector.multi_reduction <add>, %27, %cst_8 [1] : vector<8x8xf32> to vector<8xf32>
    %29 = vector.shape_cast %28 : vector<8xf32> to vector<8x1xf32>
    %30 = tpu.reciprocal %29 : vector<8x1xf32> -> vector<8x1xf32>
    %31 = vector.broadcast %30 : vector<8x1xf32> to vector<8x8xf32>
    %32 = arith.mulf %27, %31 : vector<8x8xf32>
    %cst_9 = arith.constant dense<0.000000e+00> : vector<8x8xf32>
    %33 = tpu.matmul %32, %19, %cst_9 {dimension_numbers = #tpu.dot_dimension_numbers<[1], [0], [0], [1], [0, 0, 1, 1], [], []>} : vector<8x8xf32>, vector<8x8xf32>, vector<8x8xf32> -> vector<8x8xf32>
    %34 = vector.extract_strided_slice %14 {offsets = [0, 8], sizes = [8, 8], strides = [1, 1]} : vector<8x96xf32> to vector<8x8xf32>
    %35 = vector.extract_strided_slice %16 {offsets = [8, 0], sizes = [8, 8], strides = [1, 1]} : vector<32x8xf32> to vector<8x8xf32>
    %36 = vector.extract_strided_slice %14 {offsets = [0, 72], sizes = [8, 8], strides = [1, 1]} : vector<8x96xf32> to vector<8x8xf32>
    %cst_10 = arith.constant dense<0.000000e+00> : vector<8x8xf32>
    %37 = tpu.matmul %34, %35, %cst_10 {dimension_numbers = #tpu.dot_dimension_numbers<[1], [0], [0], [1], [0, 0, 1, 1], [], []>} : vector<8x8xf32>, vector<8x8xf32>, vector<8x8xf32> -> vector<8x8xf32>
    %cst_11 = arith.constant 0.353553385 : f32
    %38 = vector.broadcast %cst_11 : f32 to vector<8x8xf32>
    %39 = arith.mulf %37, %38 : vector<8x8xf32>
    %cst_12 = arith.constant dense<0xFF800000> : vector<8xf32>
    %40 = vector.multi_reduction <maximumf>, %39, %cst_12 [1] : vector<8x8xf32> to vector<8xf32>
    %41 = vector.shape_cast %40 : vector<8xf32> to vector<8x1xf32>
    %42 = vector.broadcast %41 : vector<8x1xf32> to vector<8x8xf32>
    %43 = arith.subf %39, %42 : vector<8x8xf32>
    %44 = math.exp %43 : vector<8x8xf32>
    %cst_13 = arith.constant dense<0.000000e+00> : vector<8xf32>
    %45 = vector.multi_reduction <add>, %44, %cst_13 [1] : vector<8x8xf32> to vector<8xf32>
    %46 = vector.shape_cast %45 : vector<8xf32> to vector<8x1xf32>
    %47 = tpu.reciprocal %46 : vector<8x1xf32> -> vector<8x1xf32>
    %48 = vector.broadcast %47 : vector<8x1xf32> to vector<8x8xf32>
    %49 = arith.mulf %44, %48 : vector<8x8xf32>
    %cst_14 = arith.constant dense<0.000000e+00> : vector<8x8xf32>
    %50 = tpu.matmul %49, %36, %cst_14 {dimension_numbers = #tpu.dot_dimension_numbers<[1], [0], [0], [1], [0, 0, 1, 1], [], []>} : vector<8x8xf32>, vector<8x8xf32>, vector<8x8xf32> -> vector<8x8xf32>
    %51 = vector.extract_strided_slice %14 {offsets = [0, 16], sizes = [8, 8], strides = [1, 1]} : vector<8x96xf32> to vector<8x8xf32>
    %52 = vector.extract_strided_slice %16 {offsets = [16, 0], sizes = [8, 8], strides = [1, 1]} : vector<32x8xf32> to vector<8x8xf32>
    %53 = vector.extract_strided_slice %14 {offsets = [0, 80], sizes = [8, 8], strides = [1, 1]} : vector<8x96xf32> to vector<8x8xf32>
    %cst_15 = arith.constant dense<0.000000e+00> : vector<8x8xf32>
    %54 = tpu.matmul %51, %52, %cst_15 {dimension_numbers = #tpu.dot_dimension_numbers<[1], [0], [0], [1], [0, 0, 1, 1], [], []>} : vector<8x8xf32>, vector<8x8xf32>, vector<8x8xf32> -> vector<8x8xf32>
    %cst_16 = arith.constant 0.353553385 : f32
    %55 = vector.broadcast %cst_16 : f32 to vector<8x8xf32>
    %56 = arith.mulf %54, %55 : vector<8x8xf32>
    %cst_17 = arith.constant dense<0xFF800000> : vector<8xf32>
    %57 = vector.multi_reduction <maximumf>, %56, %cst_17 [1] : vector<8x8xf32> to vector<8xf32>
    %58 = vector.shape_cast %57 : vector<8xf32> to vector<8x1xf32>
    %59 = vector.broadcast %58 : vector<8x1xf32> to vector<8x8xf32>
    %60 = arith.subf %56, %59 : vector<8x8xf32>
    %61 = math.exp %60 : vector<8x8xf32>
    %cst_18 = arith.constant dense<0.000000e+00> : vector<8xf32>
    %62 = vector.multi_reduction <add>, %61, %cst_18 [1] : vector<8x8xf32> to vector<8xf32>
    %63 = vector.shape_cast %62 : vector<8xf32> to vector<8x1xf32>
    %64 = tpu.reciprocal %63 : vector<8x1xf32> -> vector<8x1xf32>
    %65 = vector.broadcast %64 : vector<8x1xf32> to vector<8x8xf32>
    %66 = arith.mulf %61, %65 : vector<8x8xf32>
    %cst_19 = arith.constant dense<0.000000e+00> : vector<8x8xf32>
    %67 = tpu.matmul %66, %53, %cst_19 {dimension_numbers = #tpu.dot_dimension_numbers<[1], [0], [0], [1], [0, 0, 1, 1], [], []>} : vector<8x8xf32>, vector<8x8xf32>, vector<8x8xf32> -> vector<8x8xf32>
    %68 = vector.extract_strided_slice %14 {offsets = [0, 24], sizes = [8, 8], strides = [1, 1]} : vector<8x96xf32> to vector<8x8xf32>
    %69 = vector.extract_strided_slice %16 {offsets = [24, 0], sizes = [8, 8], strides = [1, 1]} : vector<32x8xf32> to vector<8x8xf32>
    %70 = vector.extract_strided_slice %14 {offsets = [0, 88], sizes = [8, 8], strides = [1, 1]} : vector<8x96xf32> to vector<8x8xf32>
    %cst_20 = arith.constant dense<0.000000e+00> : vector<8x8xf32>
    %71 = tpu.matmul %68, %69, %cst_20 {dimension_numbers = #tpu.dot_dimension_numbers<[1], [0], [0], [1], [0, 0, 1, 1], [], []>} : vector<8x8xf32>, vector<8x8xf32>, vector<8x8xf32> -> vector<8x8xf32>
    %cst_21 = arith.constant 0.353553385 : f32
    %72 = vector.broadcast %cst_21 : f32 to vector<8x8xf32>
    %73 = arith.mulf %71, %72 : vector<8x8xf32>
    %cst_22 = arith.constant dense<0xFF800000> : vector<8xf32>
    %74 = vector.multi_reduction <maximumf>, %73, %cst_22 [1] : vector<8x8xf32> to vector<8xf32>
    %75 = vector.shape_cast %74 : vector<8xf32> to vector<8x1xf32>
    %76 = vector.broadcast %75 : vector<8x1xf32> to vector<8x8xf32>
    %77 = arith.subf %73, %76 : vector<8x8xf32>
    %78 = math.exp %77 : vector<8x8xf32>
    %cst_23 = arith.constant dense<0.000000e+00> : vector<8xf32>
    %79 = vector.multi_reduction <add>, %78, %cst_23 [1] : vector<8x8xf32> to vector<8xf32>
    %80 = vector.shape_cast %79 : vector<8xf32> to vector<8x1xf32>
    %81 = tpu.reciprocal %80 : vector<8x1xf32> -> vector<8x1xf32>
    %82 = vector.broadcast %81 : vector<8x1xf32> to vector<8x8xf32>
    %83 = arith.mulf %78, %82 : vector<8x8xf32>
    %cst_24 = arith.constant dense<0.000000e+00> : vector<8x8xf32>
    %84 = tpu.matmul %83, %70, %cst_24 {dimension_numbers = #tpu.dot_dimension_numbers<[1], [0], [0], [1], [0, 0, 1, 1], [], []>} : vector<8x8xf32>, vector<8x8xf32>, vector<8x8xf32> -> vector<8x8xf32>
    %85 = tpu.concatenate %33, %50, %67, %84 in 1 : vector<8x8xf32>, vector<8x8xf32>, vector<8x8xf32>, vector<8x8xf32> -> vector<8x32xf32>
    %86 = vector.extract_strided_slice %13 {offsets = [8, 0], sizes = [8, 96], strides = [1, 1]} : vector<16x96xf32> to vector<8x96xf32>
    %87 = vector.extract_strided_slice %86 {offsets = [0, 32], sizes = [8, 32], strides = [1, 1]} : vector<8x96xf32> to vector<8x32xf32>
    %88 = tpu.transpose %87, [1, 0] : vector<8x32xf32> -> vector<32x8xf32>
    %89 = vector.extract_strided_slice %86 {offsets = [0, 0], sizes = [8, 8], strides = [1, 1]} : vector<8x96xf32> to vector<8x8xf32>
    %90 = vector.extract_strided_slice %88 {offsets = [0, 0], sizes = [8, 8], strides = [1, 1]} : vector<32x8xf32> to vector<8x8xf32>
    %91 = vector.extract_strided_slice %86 {offsets = [0, 64], sizes = [8, 8], strides = [1, 1]} : vector<8x96xf32> to vector<8x8xf32>
    %cst_25 = arith.constant dense<0.000000e+00> : vector<8x8xf32>
    %92 = tpu.matmul %89, %90, %cst_25 {dimension_numbers = #tpu.dot_dimension_numbers<[1], [0], [0], [1], [0, 0, 1, 1], [], []>} : vector<8x8xf32>, vector<8x8xf32>, vector<8x8xf32> -> vector<8x8xf32>
    %cst_26 = arith.constant 0.353553385 : f32
    %93 = vector.broadcast %cst_26 : f32 to vector<8x8xf32>
    %94 = arith.mulf %92, %93 : vector<8x8xf32>
    %cst_27 = arith.constant dense<0xFF800000> : vector<8xf32>
    %95 = vector.multi_reduction <maximumf>, %94, %cst_27 [1] : vector<8x8xf32> to vector<8xf32>
    %96 = vector.shape_cast %95 : vector<8xf32> to vector<8x1xf32>
    %97 = vector.broadcast %96 : vector<8x1xf32> to vector<8x8xf32>
    %98 = arith.subf %94, %97 : vector<8x8xf32>
    %99 = math.exp %98 : vector<8x8xf32>
    %cst_28 = arith.constant dense<0.000000e+00> : vector<8xf32>
    %100 = vector.multi_reduction <add>, %99, %cst_28 [1] : vector<8x8xf32> to vector<8xf32>
    %101 = vector.shape_cast %100 : vector<8xf32> to vector<8x1xf32>
    %102 = tpu.reciprocal %101 : vector<8x1xf32> -> vector<8x1xf32>
    %103 = vector.broadcast %102 : vector<8x1xf32> to vector<8x8xf32>
    %104 = arith.mulf %99, %103 : vector<8x8xf32>
    %cst_29 = arith.constant dense<0.000000e+00> : vector<8x8xf32>
    %105 = tpu.matmul %104, %91, %cst_29 {dimension_numbers = #tpu.dot_dimension_numbers<[1], [0], [0], [1], [0, 0, 1, 1], [], []>} : vector<8x8xf32>, vector<8x8xf32>, vector<8x8xf32> -> vector<8x8xf32>
    %106 = vector.extract_strided_slice %86 {offsets = [0, 8], sizes = [8, 8], strides = [1, 1]} : vector<8x96xf32> to vector<8x8xf32>
    %107 = vector.extract_strided_slice %88 {offsets = [8, 0], sizes = [8, 8], strides = [1, 1]} : vector<32x8xf32> to vector<8x8xf32>
    %108 = vector.extract_strided_slice %86 {offsets = [0, 72], sizes = [8, 8], strides = [1, 1]} : vector<8x96xf32> to vector<8x8xf32>
    %cst_30 = arith.constant dense<0.000000e+00> : vector<8x8xf32>
    %109 = tpu.matmul %106, %107, %cst_30 {dimension_numbers = #tpu.dot_dimension_numbers<[1], [0], [0], [1], [0, 0, 1, 1], [], []>} : vector<8x8xf32>, vector<8x8xf32>, vector<8x8xf32> -> vector<8x8xf32>
    %cst_31 = arith.constant 0.353553385 : f32
    %110 = vector.broadcast %cst_31 : f32 to vector<8x8xf32>
    %111 = arith.mulf %109, %110 : vector<8x8xf32>
    %cst_32 = arith.constant dense<0xFF800000> : vector<8xf32>
    %112 = vector.multi_reduction <maximumf>, %111, %cst_32 [1] : vector<8x8xf32> to vector<8xf32>
    %113 = vector.shape_cast %112 : vector<8xf32> to vector<8x1xf32>
    %114 = vector.broadcast %113 : vector<8x1xf32> to vector<8x8xf32>
    %115 = arith.subf %111, %114 : vector<8x8xf32>
    %116 = math.exp %115 : vector<8x8xf32>
    %cst_33 = arith.constant dense<0.000000e+00> : vector<8xf32>
    %117 = vector.multi_reduction <add>, %116, %cst_33 [1] : vector<8x8xf32> to vector<8xf32>
    %118 = vector.shape_cast %117 : vector<8xf32> to vector<8x1xf32>
    %119 = tpu.reciprocal %118 : vector<8x1xf32> -> vector<8x1xf32>
    %120 = vector.broadcast %119 : vector<8x1xf32> to vector<8x8xf32>
    %121 = arith.mulf %116, %120 : vector<8x8xf32>
    %cst_34 = arith.constant dense<0.000000e+00> : vector<8x8xf32>
    %122 = tpu.matmul %121, %108, %cst_34 {dimension_numbers = #tpu.dot_dimension_numbers<[1], [0], [0], [1], [0, 0, 1, 1], [], []>} : vector<8x8xf32>, vector<8x8xf32>, vector<8x8xf32> -> vector<8x8xf32>
    %123 = vector.extract_strided_slice %86 {offsets = [0, 16], sizes = [8, 8], strides = [1, 1]} : vector<8x96xf32> to vector<8x8xf32>
    %124 = vector.extract_strided_slice %88 {offsets = [16, 0], sizes = [8, 8], strides = [1, 1]} : vector<32x8xf32> to vector<8x8xf32>
    %125 = vector.extract_strided_slice %86 {offsets = [0, 80], sizes = [8, 8], strides = [1, 1]} : vector<8x96xf32> to vector<8x8xf32>
    %cst_35 = arith.constant dense<0.000000e+00> : vector<8x8xf32>
    %126 = tpu.matmul %123, %124, %cst_35 {dimension_numbers = #tpu.dot_dimension_numbers<[1], [0], [0], [1], [0, 0, 1, 1], [], []>} : vector<8x8xf32>, vector<8x8xf32>, vector<8x8xf32> -> vector<8x8xf32>
    %cst_36 = arith.constant 0.353553385 : f32
    %127 = vector.broadcast %cst_36 : f32 to vector<8x8xf32>
    %128 = arith.mulf %126, %127 : vector<8x8xf32>
    %cst_37 = arith.constant dense<0xFF800000> : vector<8xf32>
    %129 = vector.multi_reduction <maximumf>, %128, %cst_37 [1] : vector<8x8xf32> to vector<8xf32>
    %130 = vector.shape_cast %129 : vector<8xf32> to vector<8x1xf32>
    %131 = vector.broadcast %130 : vector<8x1xf32> to vector<8x8xf32>
    %132 = arith.subf %128, %131 : vector<8x8xf32>
    %133 = math.exp %132 : vector<8x8xf32>
    %cst_38 = arith.constant dense<0.000000e+00> : vector<8xf32>
    %134 = vector.multi_reduction <add>, %133, %cst_38 [1] : vector<8x8xf32> to vector<8xf32>
    %135 = vector.shape_cast %134 : vector<8xf32> to vector<8x1xf32>
    %136 = tpu.reciprocal %135 : vector<8x1xf32> -> vector<8x1xf32>
    %137 = vector.broadcast %136 : vector<8x1xf32> to vector<8x8xf32>
    %138 = arith.mulf %133, %137 : vector<8x8xf32>
    %cst_39 = arith.constant dense<0.000000e+00> : vector<8x8xf32>
    %139 = tpu.matmul %138, %125, %cst_39 {dimension_numbers = #tpu.dot_dimension_numbers<[1], [0], [0], [1], [0, 0, 1, 1], [], []>} : vector<8x8xf32>, vector<8x8xf32>, vector<8x8xf32> -> vector<8x8xf32>
    %140 = vector.extract_strided_slice %86 {offsets = [0, 24], sizes = [8, 8], strides = [1, 1]} : vector<8x96xf32> to vector<8x8xf32>
    %141 = vector.extract_strided_slice %88 {offsets = [24, 0], sizes = [8, 8], strides = [1, 1]} : vector<32x8xf32> to vector<8x8xf32>
    %142 = vector.extract_strided_slice %86 {offsets = [0, 88], sizes = [8, 8], strides = [1, 1]} : vector<8x96xf32> to vector<8x8xf32>
    %cst_40 = arith.constant dense<0.000000e+00> : vector<8x8xf32>
    %143 = tpu.matmul %140, %141, %cst_40 {dimension_numbers = #tpu.dot_dimension_numbers<[1], [0], [0], [1], [0, 0, 1, 1], [], []>} : vector<8x8xf32>, vector<8x8xf32>, vector<8x8xf32> -> vector<8x8xf32>
    %cst_41 = arith.constant 0.353553385 : f32
    %144 = vector.broadcast %cst_41 : f32 to vector<8x8xf32>
    %145 = arith.mulf %143, %144 : vector<8x8xf32>
    %cst_42 = arith.constant dense<0xFF800000> : vector<8xf32>
    %146 = vector.multi_reduction <maximumf>, %145, %cst_42 [1] : vector<8x8xf32> to vector<8xf32>
    %147 = vector.shape_cast %146 : vector<8xf32> to vector<8x1xf32>
    %148 = vector.broadcast %147 : vector<8x1xf32> to vector<8x8xf32>
    %149 = arith.subf %145, %148 : vector<8x8xf32>
    %150 = math.exp %149 : vector<8x8xf32>
    %cst_43 = arith.constant dense<0.000000e+00> : vector<8xf32>
    %151 = vector.multi_reduction <add>, %150, %cst_43 [1] : vector<8x8xf32> to vector<8xf32>
    %152 = vector.shape_cast %151 : vector<8xf32> to vector<8x1xf32>
    %153 = tpu.reciprocal %152 : vector<8x1xf32> -> vector<8x1xf32>
    %154 = vector.broadcast %153 : vector<8x1xf32> to vector<8x8xf32>
    %155 = arith.mulf %150, %154 : vector<8x8xf32>
    %cst_44 = arith.constant dense<0.000000e+00> : vector<8x8xf32>
    %156 = tpu.matmul %155, %142, %cst_44 {dimension_numbers = #tpu.dot_dimension_numbers<[1], [0], [0], [1], [0, 0, 1, 1], [], []>} : vector<8x8xf32>, vector<8x8xf32>, vector<8x8xf32> -> vector<8x8xf32>
    %157 = tpu.concatenate %105, %122, %139, %156 in 1 : vector<8x8xf32>, vector<8x8xf32>, vector<8x8xf32>, vector<8x8xf32> -> vector<8x32xf32>
    %158 = tpu.concatenate %85, %157 in 0 : vector<8x32xf32>, vector<8x32xf32> -> vector<16x32xf32>
    %c0_45 = arith.constant 0 : index
    %c0_46 = arith.constant 0 : index
    %159 = vector.load %arg2[%c0_45, %c0_46] : memref<32x32xf32, #tpu.memory_space<vmem>>, vector<32x32xf32>
    %cst_47 = arith.constant dense<0.000000e+00> : vector<16x32xf32>
    %160 = tpu.matmul %158, %159, %cst_47 {dimension_numbers = #tpu.dot_dimension_numbers<[1], [0], [0], [1], [0, 0, 1, 1], [], []>} : vector<16x32xf32>, vector<32x32xf32>, vector<16x32xf32> -> vector<16x32xf32>
    %161 = vector.broadcast %3 : vector<1x32xf32> to vector<16x32xf32>
    %162 = arith.addf %160, %161 : vector<16x32xf32>
    %163 = arith.addf %0, %162 : vector<16x32xf32>
    %cst_48 = arith.constant dense<0.000000e+00> : vector<16xf32>
    %164 = vector.multi_reduction <add>, %163, %cst_48 [1] : vector<16x32xf32> to vector<16xf32>
    %165 = vector.shape_cast %164 : vector<16xf32> to vector<16x1xf32>
    %cst_49 = arith.constant 3.200000e+01 : f32
    %166 = vector.broadcast %cst_49 : f32 to vector<16x1xf32>
    %167 = arith.divf %165, %166 : vector<16x1xf32>
    %168 = arith.mulf %163, %163 : vector<16x32xf32>
    %cst_50 = arith.constant dense<0.000000e+00> : vector<16xf32>
    %169 = vector.multi_reduction <add>, %168, %cst_50 [1] : vector<16x32xf32> to vector<16xf32>
    %170 = vector.shape_cast %169 : vector<16xf32> to vector<16x1xf32>
    %cst_51 = arith.constant 3.200000e+01 : f32
    %171 = vector.broadcast %cst_51 : f32 to vector<16x1xf32>
    %172 = arith.divf %170, %171 : vector<16x1xf32>
    %173 = arith.mulf %167, %167 : vector<16x1xf32>
    %174 = arith.subf %172, %173 : vector<16x1xf32>
    %175 = vector.broadcast %167 : vector<16x1xf32> to vector<16x32xf32>
    %176 = arith.subf %163, %175 : vector<16x32xf32>
    %cst_52 = arith.constant 9.99999974E-6 : f32
    %177 = vector.broadcast %cst_52 : f32 to vector<16x1xf32>
    %178 = arith.addf %174, %177 : vector<16x1xf32>
    %179 = math.rsqrt %178 : vector<16x1xf32>
    %180 = vector.broadcast %179 : vector<16x1xf32> to vector<16x32xf32>
    %181 = arith.mulf %176, %180 : vector<16x32xf32>
    %182 = vector.broadcast %4 : vector<1x32xf32> to vector<16x32xf32>
    %183 = arith.mulf %181, %182 : vector<16x32xf32>
    %184 = vector.broadcast %5 : vector<1x32xf32> to vector<16x32xf32>
    %185 = arith.addf %183, %184 : vector<16x32xf32>
    %c0_53 = arith.constant 0 : index
    %c0_54 = arith.constant 0 : index
    %186 = vector.load %arg3[%c0_53, %c0_54] : memref<32x64xf32, #tpu.memory_space<vmem>>, vector<32x64xf32>
    %cst_55 = arith.constant dense<0.000000e+00> : vector<16x64xf32>
    %187 = tpu.matmul %185, %186, %cst_55 {dimension_numbers = #tpu.dot_dimension_numbers<[1], [0], [0], [1], [0, 0, 1, 1], [], []>} : vector<16x32xf32>, vector<32x64xf32>, vector<16x64xf32> -> vector<16x64xf32>
    %188 = vector.broadcast %6 : vector<1x64xf32> to vector<16x64xf32>
    %189 = arith.addf %187, %188 : vector<16x64xf32>
    %cst_56 = arith.constant 0.000000e+00 : f32
    %190 = vector.broadcast %cst_56 : f32 to vector<16x64xf32>
    %191 = arith.maximumf %189, %190 : vector<16x64xf32>
    %c0_57 = arith.constant 0 : index
    %c0_58 = arith.constant 0 : index
    %192 = vector.load %arg4[%c0_57, %c0_58] : memref<64x32xf32, #tpu.memory_space<vmem>>, vector<64x32xf32>
    %cst_59 = arith.constant dense<0.000000e+00> : vector<16x32xf32>
    %193 = tpu.matmul %191, %192, %cst_59 {dimension_numbers = #tpu.dot_dimension_numbers<[1], [0], [0], [1], [0, 0, 1, 1], [], []>} : vector<16x64xf32>, vector<64x32xf32>, vector<16x32xf32> -> vector<16x32xf32>
    %194 = vector.broadcast %7 : vector<1x32xf32> to vector<16x32xf32>
    %195 = arith.addf %193, %194 : vector<16x32xf32>
    %196 = arith.addf %185, %195 : vector<16x32xf32>
    %cst_60 = arith.constant dense<0.000000e+00> : vector<16xf32>
    %197 = vector.multi_reduction <add>, %196, %cst_60 [1] : vector<16x32xf32> to vector<16xf32>
    %198 = vector.shape_cast %197 : vector<16xf32> to vector<16x1xf32>
    %cst_61 = arith.constant 3.200000e+01 : f32
    %199 = vector.broadcast %cst_61 : f32 to vector<16x1xf32>
    %200 = arith.divf %198, %199 : vector<16x1xf32>
    %201 = arith.mulf %196, %196 : vector<16x32xf32>
    %cst_62 = arith.constant dense<0.000000e+00> : vector<16xf32>
    %202 = vector.multi_reduction <add>, %201, %cst_62 [1] : vector<16x32xf32> to vector<16xf32>
    %203 = vector.shape_cast %202 : vector<16xf32> to vector<16x1xf32>
    %cst_63 = arith.constant 3.200000e+01 : f32
    %204 = vector.broadcast %cst_63 : f32 to vector<16x1xf32>
    %205 = arith.divf %203, %204 : vector<16x1xf32>
    %206 = arith.mulf %200, %200 : vector<16x1xf32>
    %207 = arith.subf %205, %206 : vector<16x1xf32>
    %208 = vector.broadcast %200 : vector<16x1xf32> to vector<16x32xf32>
    %209 = arith.subf %196, %208 : vector<16x32xf32>
    %cst_64 = arith.constant 9.99999974E-6 : f32
    %210 = vector.broadcast %cst_64 : f32 to vector<16x1xf32>
    %211 = arith.addf %207, %210 : vector<16x1xf32>
    %212 = math.rsqrt %211 : vector<16x1xf32>
    %213 = vector.broadcast %212 : vector<16x1xf32> to vector<16x32xf32>
    %214 = arith.mulf %209, %213 : vector<16x32xf32>
    %215 = vector.broadcast %8 : vector<1x32xf32> to vector<16x32xf32>
    %216 = arith.mulf %214, %215 : vector<16x32xf32>
    %217 = vector.broadcast %9 : vector<1x32xf32> to vector<16x32xf32>
    %218 = arith.addf %216, %217 : vector<16x32xf32>
    %c0_65 = arith.constant 0 : index
    %c0_66 = arith.constant 0 : index
    %219 = vector.load %arg6[%c0_65, %c0_66] : memref<16x32xf32, #tpu.memory_space<vmem>>, vector<16x32xf32>
    tpu.vector_store %arg6[%c0_65, %c0_66], %218 {strides = array<i32>} : memref<16x32xf32, #tpu.memory_space<vmem>>, vector<16x32xf32>,
    return
  }
}

</mosaic_0001>

<llo_original>
// kernel: encoder_layer.1
$region0: #{encoder_layer.1}
  #allocation0 [shape = 'u32[]', space=smem, size = 0x4, offset = 0x4, fixed_abs, tag = 'smem constant byte address 0x4 - core index']
  #allocation1 [shape = 'u32[144,128]{1,0:T(1,128)}', space=vmem, size = 0x12000, scoped, tag = 'internal scratch']
  %s0 = inlined_call_operand.hbm [shape: f32[16,32], index: 0, kind: input, shape index: {}]
  %s1 = inlined_call_operand.vmem [shape: f32[32,96], index: 1, kind: input, shape index: {}]
  %s2 = inlined_call_operand.vmem [shape: f32[32,32], index: 2, kind: input, shape index: {}]
  %s3 = inlined_call_operand.vmem [shape: f32[32,64], index: 3, kind: input, shape index: {}]
  %s4 = inlined_call_operand.vmem [shape: f32[64,32], index: 4, kind: input, shape index: {}]
  %s5 = inlined_call_operand.vmem [shape: f32[8,96], index: 5, kind: input, shape index: {}]
  %s6 = inlined_call_operand.hbm [shape: f32[16,32], index: 6, kind: output, shape index: {}]
  %s7 = sld [smem:[#allocation0]]
  $region38: #{encoder_layer.1} parent=0
    _
  %s9 = ssub.s32 1, %s7
  %s10 = scalar_select 0, %s9, %s7
  $region1: #{encoder_layer.1} parent=0
    #allocation2 [shape = 'u8[8192]{0}', space=vmem, size = 0x2000, scoped, tag = 'input window, operand 0, single buffered']
    #allocation3 [shape = 's32[1]{0}', space=sflag, size = 0x4, scoped, tag = 'scoped memory for encoder_layer.1']
    #allocation4 [shape = 's32[1]{0}', space=sflag, size = 0x4, scoped, tag = 'scoped memory for encoder_layer.1']
    #allocation5 [shape = 'u8[8192]{0}', space=vmem, size = 0x2000, scoped, tag = 'output window, operand 0, single buffered']
    %11 = vsyncpa [#allocation3], 0
    %12 = vsyncpa [#allocation4], 0
    // Predicated region
    $region2: #{encoder_layer.1} parent=1 // pred_check
      _
    $region3: #{encoder_layer.1} parent=1 // pred_check_branch
      %14 = sbr.rel (0) target = $region5
    $region4: #{encoder_layer.1} parent=1 // pred_region
      %s16 = ssub.s32 256, 256
      %17 = vsyncadd [#allocation3], %s16
      %s18 = sshll.u32 [#allocation2], 4
      %s19 = int_to_ptr.vmem [resolvable:$true] %s18
      %24 = dma.hbm_to_vmem [thread:$0]  %s0, 256, %s19, [#allocation3], 128, 128, 8
    $region5: #{encoder_layer.1} parent=1 // pred_fallthru
      _
    // Predicated region
    $region6: #{encoder_layer.1} parent=1 // pred_check
      _
    $region7: #{encoder_layer.1} parent=1 // pred_check_branch
      %26 = sbr.rel (0) target = $region9
    $region8: #{encoder_layer.1} parent=1 // pred_region
      _
    $region9: #{encoder_layer.1} parent=1 // pred_fallthru
      _
    // Predicated region
    $region10: #{encoder_layer.1} parent=1 // pred_check
      _
    $region11: #{encoder_layer.1} parent=1 // pred_check_branch
      %28 = sbr.rel (0) target = $region13
    $region12: #{encoder_layer.1} parent=1 // pred_region
      _
    $region13: #{encoder_layer.1} parent=1 // pred_fallthru
      _
    // Predicated region
    $region14: #{encoder_layer.1} parent=1 // pred_check
      _
    $region15: #{encoder_layer.1} parent=1 // pred_check_branch
      %30 = sbr.rel (0) target = $region17
    $region16: #{encoder_layer.1} parent=1 // pred_region
      _
    $region17: #{encoder_layer.1} parent=1 // pred_fallthru
      _
    // Predicated region
    $region18: #{encoder_layer.1} parent=1 // pred_check
      _
    $region19: #{encoder_layer.1} parent=1 // pred_check_branch
      %32 = sbr.rel (0) target = $region21
    $region20: #{encoder_layer.1} parent=1 // pred_region
      _
    $region21: #{encoder_layer.1} parent=1 // pred_fallthru
      _
    // Predicated region
    $region22: #{encoder_layer.1} parent=1 // pred_check
      _
    $region23: #{encoder_layer.1} parent=1 // pred_check_branch
      %34 = sbr.rel (0) target = $region25
    $region24: #{encoder_layer.1} parent=1 // pred_region
      _
    $region25: #{encoder_layer.1} parent=1 // pred_fallthru
      _
    // Predicated region
    $region26: #{encoder_layer.1} parent=1 // pred_check
      _
    $region27: #{encoder_layer.1} parent=1 // pred_check_branch
      %36 = sbr.rel (0) target = $region29
    $region28: #{encoder_layer.1} parent=1 // pred_region
      %37 = dma.done [#allocation3], 256
    $region29: #{encoder_layer.1} parent=1 // pred_fallthru
      _
    %v38 = vld [vmem:[#allocation2] sm:$0xff]
    %v39 = vld [vmem:[#allocation2 + $0x8] sm:$0xff]
    %v40 = vld [vmem:[%s5] sm:$0xff]
    %v41 = vld [vmem:[%s1] sm:$0xff]
    %v42 = vld [vmem:[%s1 + $0x8] sm:$0xff]
    %v43 = vld [vmem:[%s1 + $0x10] sm:$0xff]
    %v44 = vld [vmem:[%s1 + $0x18] sm:$0xff]
    %v45 = vlaneseq
    %v46 = vshrl.u32 %v45, 7
    %v47 = vsub.s32 0, %v46
    %v48 = vrot.slane %v40, %v47
    %vm49 = vcmask 261120
    %v51 = vsel %vm49, %v38, 0
    %v54 = vsel %vm49, %v39, 0
    %56 = vmatprep.subr.mxu0 0.0
    %57 = vmatpush1.msra.mxu0 %v41
    %58 = vmatprep.subr.mxu0 0.0
    %59 = vmatpush1.msra.mxu0 %v42
    %60 = vmatprep.subr.mxu0 0.0
    %61 = vmatpush1.msra.mxu0 %v43
    %62 = vmatprep.subr.mxu0 0.0
    %63 = vmatpush1.msra.mxu0 %v44
    %64 = vmatprep.subr.mxu0 0.0
    %65 = vmatpush1.msra.mxu0 0.0
    %66 = vmatprep.subr.mxu0 0.0
    %67 = vmatpush1.msra.mxu0 0.0
    %68 = vmatprep.subr.mxu0 0.0
    %69 = vmatpush1.msra.mxu0 0.0
    %70 = vmatprep.subr.mxu0 0.0
    %71 = vmatpush1.msra.mxu0 0.0
    %72 = vmatprep.subr.mxu0 0.0
    %73 = vmatpush1.msra.mxu0 0.0
    %74 = vmatprep.subr.mxu0 0.0
    %75 = vmatpush1.msra.mxu0 0.0
    %76 = vmatprep.subr.mxu0 0.0
    %77 = vmatpush1.msra.mxu0 0.0
    %78 = vmatprep.subr.mxu0 0.0
    %79 = vmatpush1.msra.mxu0 0.0
    %80 = vmatprep.subr.mxu0 0.0
    %81 = vmatpush1.msra.mxu0 0.0
    %82 = vmatprep.subr.mxu0 0.0
    %83 = vmatpush1.msra.mxu0 0.0
    %84 = vmatprep.subr.mxu0 0.0
    %85 = vmatpush1.msra.mxu0 0.0
    %86 = vmatprep.subr.mxu0 0.0
    %87 = vmatpush1.msra.mxu0 0.0
    %88 = vmatprep.subr.mxu0 0.0
    %89 = vmatpush1.msra.mxu0 0.0
    %90 = vmatprep.subr.mxu0 0.0
    %91 = vmatpush1.msra.mxu0 0.0
    %92 = vmatprep.subr.mxu0 0.0
    %93 = vmatpush1.msra.mxu0 0.0
    %94 = vmatprep.subr.mxu0 0.0
    %95 = vmatpush1.msra.mxu0 0.0
    %96 = vmatprep.subr.mxu0 0.0
    %97 = vmatpush1.msra.mxu0 0.0
    %98 = vmatprep.subr.mxu0 0.0
    %99 = vmatpush1.msra.mxu0 0.0
    %100 = vmatprep.subr.mxu0 0.0
    %101 = vmatpush1.msra.mxu0 0.0
    %102 = vmatprep.subr.mxu0 0.0
    %103 = vmatpush1.msra.mxu0 0.0
    %104 = vmatprep.subr.mxu0 0.0
    %105 = vmatpush1.msra.mxu0 0.0
    %106 = vmatprep.subr.mxu0 0.0
    %107 = vmatpush1.msra.mxu0 0.0
    %108 = vmatprep.subr.mxu0 0.0
    %109 = vmatpush1.msra.mxu0 0.0
    %110 = vmatprep.subr.mxu0 0.0
    %111 = vmatpush1.msra.mxu0 0.0
    %112 = vmatprep.subr.mxu0 0.0
    %113 = vmatpush1.msra.mxu0 0.0
    %114 = vmatprep.subr.mxu0 0.0
    %115 = vmatpush1.msra.mxu0 0.0
    %116 = vmatprep.subr.mxu0 0.0
    %117 = vmatpush1.msra.mxu0 0.0
    %118 = vmatprep.subr.mxu0 0.0
    %119 = vmatpush1.msra.mxu0 0.0
    %120 = vmatprep.mubr.f32.mxu0 0.0
    %121 = vmatmul.mubr.f32.gmra.mrb[0].mxu0 %v51
    %v122 = vpop.f32.mrb[0].mxu0
    %v123 = vadd.f32 %v48, %v122
    %v124 = vpop.f32.mrb[0].mxu0
    %125 = vmatprep.mubr.f32.mxu0 0.0
    %126 = vmatmul.mubr.f32.gmra.mrb[0].mxu0 %v54
    %v127 = vpop.f32.mrb[0].mxu0
    %v128 = vadd.f32 %v48, %v127
    %v129 = vpop.f32.mrb[0].mxu0
    %130 = vdwg.mxu0
    %132 = vrot.lane.b32.xlu0 %v123, 96
    %v133 = vpop.permute.xlu0 %132
    %vm134 = vcmask 64512
    %v135 = vsel %vm134, %v123, 0
    %v137 = vsel %vm134, %v133, 0
    %139 = vmatprep.subr.mxu0 0.0
    %140 = vmatpush1.xpose.msra.mxu0 %v137
    %141 = vmatprep.subr.mxu0 0.0
    %142 = vmatpush1.xpose.msra.mxu0 0.0
    %143 = vmatprep.subr.mxu0 0.0
    %144 = vmatpush1.xpose.msra.mxu0 0.0
    %145 = vmatprep.subr.mxu0 0.0
    %146 = vmatpush1.xpose.msra.mxu0 0.0
    %147 = vmatprep.subr.mxu0 0.0
    %148 = vmatpush1.xpose.msra.mxu0 0.0
    %149 = vmatprep.subr.mxu0 0.0
    %150 = vmatpush1.xpose.msra.mxu0 0.0
    %151 = vmatprep.subr.mxu0 0.0
    %152 = vmatpush1.xpose.msra.mxu0 0.0
    %153 = vmatprep.subr.mxu0 0.0
    %154 = vmatpush1.xpose.msra.mxu0 0.0
    %155 = vmatprep.subr.mxu0 0.0
    %156 = vmatpush1.xpose.msra.mxu0 0.0
    %157 = vmatprep.subr.mxu0 0.0
    %158 = vmatpush1.xpose.msra.mxu0 0.0
    %159 = vmatprep.subr.mxu0 0.0
    %160 = vmatpush1.xpose.msra.mxu0 0.0
    %161 = vmatprep.subr.mxu0 0.0
    %162 = vmatpush1.xpose.msra.mxu0 0.0
    %163 = vmatprep.subr.mxu0 0.0
    %164 = vmatpush1.xpose.msra.mxu0 0.0
    %165 = vmatprep.subr.mxu0 0.0
    %166 = vmatpush1.xpose.msra.mxu0 0.0
    %167 = vmatprep.subr.mxu0 0.0
    %168 = vmatpush1.xpose.msra.mxu0 0.0
    %169 = vmatprep.subr.mxu0 0.0
    %170 = vmatpush1.xpose.msra.mxu0 0.0
    %171 = vmatprep.subr.mxu0 0.0
    %172 = vmatpush1.xpose.msra.mxu0 0.0
    %173 = vmatprep.subr.mxu0 0.0
    %174 = vmatpush1.xpose.msra.mxu0 0.0
    %175 = vmatprep.subr.mxu0 0.0
    %176 = vmatpush1.xpose.msra.mxu0 0.0
    %177 = vmatprep.subr.mxu0 0.0
    %178 = vmatpush1.xpose.msra.mxu0 0.0
    %179 = vmatprep.subr.mxu0 0.0
    %180 = vmatpush1.xpose.msra.mxu0 0.0
    %181 = vmatprep.subr.mxu0 0.0
    %182 = vmatpush1.xpose.msra.mxu0 0.0
    %183 = vmatprep.subr.mxu0 0.0
    %184 = vmatpush1.xpose.msra.mxu0 0.0
    %185 = vmatprep.subr.mxu0 0.0
    %186 = vmatpush1.xpose.msra.mxu0 0.0
    %187 = vmatprep.subr.mxu0 0.0
    %188 = vmatpush1.xpose.msra.mxu0 0.0
    %189 = vmatprep.subr.mxu0 0.0
    %190 = vmatpush1.xpose.msra.mxu0 0.0
    %191 = vmatprep.subr.mxu0 0.0
    %192 = vmatpush1.xpose.msra.mxu0 0.0
    %193 = vmatprep.subr.mxu0 0.0
    %194 = vmatpush1.xpose.msra.mxu0 0.0
    %195 = vmatprep.subr.mxu0 0.0
    %196 = vmatpush1.xpose.msra.mxu0 0.0
    %197 = vmatprep.subr.mxu0 0.0
    %198 = vmatpush1.xpose.msra.mxu0 0.0
    %199 = vmatprep.subr.mxu0 0.0
    %200 = vmatpush1.xpose.msra.mxu0 0.0
    %201 = vmatprep.subr.mxu0 0.0
    %202 = vmatpush1.xpose.msra.mxu0 0.0
    %203 = vmatprep.mubr.f32.mxu0 0.0
    %204 = vmatmul.mubr.f32.gmra.mrb[0].mxu0 %v135
    %v205 = vpop.f32.mrb[0].mxu0
    %v206 = vadd.f32 0.0, %v205
    %v207 = vpop.f32.mrb[0].mxu0
    %208 = vdwg.mxu0
    %v209 = vmul.f32 %v206, 0.35355338
    %v210 = vsel %vm134, %v209, -inf
    %211 = vmax.xlane.f32.xlu0 %v210
    %v212 = vpop.xlane.xlu0 %211
    %v213 = vsub.f32 %v209, %v212
    %v214 = vmul.f32 %v213, 1.442695
    %v215 = vpow.pop %v214
    %v216 = vsel %vm134, %v215, 0.0
    %217 = vadd.xlane.f32.xlu0 %v216
    %v218 = vpop.xlane.xlu0 %217
    %v219 = vrcp.pop %v218
    %v220 = vmul.f32 %v215, %v219
    %221 = vrot.lane.b32.xlu0 %v123, 64
    %v222 = vpop.permute.xlu0 %221
    %v225 = vsel %vm134, %v220, 0
    %227 = vmatprep.subr.mxu0 0.0
    %228 = vmatpush1.msra.mxu0 %v222
    %229 = vmatprep.subr.mxu0 0.0
    %230 = vmatpush1.msra.mxu0 0.0
    %231 = vmatprep.subr.mxu0 0.0
    %232 = vmatpush1.msra.mxu0 0.0
    %233 = vmatprep.subr.mxu0 0.0
    %234 = vmatpush1.msra.mxu0 0.0
    %235 = vmatprep.subr.mxu0 0.0
    %236 = vmatpush1.msra.mxu0 0.0
    %237 = vmatprep.subr.mxu0 0.0
    %238 = vmatpush1.msra.mxu0 0.0
    %239 = vmatprep.subr.mxu0 0.0
    %240 = vmatpush1.msra.mxu0 0.0
    %241 = vmatprep.subr.mxu0 0.0
    %242 = vmatpush1.msra.mxu0 0.0
    %243 = vmatprep.subr.mxu0 0.0
    %244 = vmatpush1.msra.mxu0 0.0
    %245 = vmatprep.subr.mxu0 0.0
    %246 = vmatpush1.msra.mxu0 0.0
    %247 = vmatprep.subr.mxu0 0.0
    %248 = vmatpush1.msra.mxu0 0.0
    %249 = vmatprep.subr.mxu0 0.0
    %250 = vmatpush1.msra.mxu0 0.0
    %251 = vmatprep.subr.mxu0 0.0
    %252 = vmatpush1.msra.mxu0 0.0
    %253 = vmatprep.subr.mxu0 0.0
    %254 = vmatpush1.msra.mxu0 0.0
    %255 = vmatprep.subr.mxu0 0.0
    %256 = vmatpush1.msra.mxu0 0.0
    %257 = vmatprep.subr.mxu0 0.0
    %258 = vmatpush1.msra.mxu0 0.0
    %259 = vmatprep.subr.mxu0 0.0
    %260 = vmatpush1.msra.mxu0 0.0
    %261 = vmatprep.subr.mxu0 0.0
    %262 = vmatpush1.msra.mxu0 0.0
    %263 = vmatprep.subr.mxu0 0.0
    %264 = vmatpush1.msra.mxu0 0.0
    %265 = vmatprep.subr.mxu0 0.0
    %266 = vmatpush1.msra.mxu0 0.0
    %267 = vmatprep.subr.mxu0 0.0
    %268 = vmatpush1.msra.mxu0 0.0
    %269 = vmatprep.subr.mxu0 0.0
    %270 = vmatpush1.msra.mxu0 0.0
    %271 = vmatprep.subr.mxu0 0.0
    %272 = vmatpush1.msra.mxu0 0.0
    %273 = vmatprep.subr.mxu0 0.0
    %274 = vmatpush1.msra.mxu0 0.0
    %275 = vmatprep.subr.mxu0 0.0
    %276 = vmatpush1.msra.mxu0 0.0
    %277 = vmatprep.subr.mxu0 0.0
    %278 = vmatpush1.msra.mxu0 0.0
    %279 = vmatprep.subr.mxu0 0.0
    %280 = vmatpush1.msra.mxu0 0.0
    %281 = vmatprep.subr.mxu0 0.0
    %282 = vmatpush1.msra.mxu0 0.0
    %283 = vmatprep.subr.mxu0 0.0
    %284 = vmatpush1.msra.mxu0 0.0
    %285 = vmatprep.subr.mxu0 0.0
    %286 = vmatpush1.msra.mxu0 0.0
    %287 = vmatprep.subr.mxu0 0.0
    %288 = vmatpush1.msra.mxu0 0.0
    %289 = vmatprep.subr.mxu0 0.0
    %290 = vmatpush1.msra.mxu0 0.0
    %291 = vmatprep.mubr.f32.mxu0 0.0
    %292 = vmatmul.mubr.f32.gmra.mrb[0].mxu0 %v225
    %v293 = vpop.f32.mrb[0].mxu0
    %v294 = vadd.f32 0.0, %v293
    %v295 = vpop.f32.mrb[0].mxu0
    %296 = vdwg.mxu0
    %297 = vrot.lane.b32.xlu0 %v123, 120
    %v298 = vpop.permute.xlu0 %297
    %299 = vrot.lane.b32.xlu0 %v123, 88
    %v300 = vpop.permute.xlu0 %299
    %v301 = vsel %vm134, %v298, 0
    %v303 = vsel %vm134, %v300, 0
    %305 = vmatprep.subr.mxu0 0.0
    %306 = vmatpush1.xpose.msra.mxu0 %v303
    %307 = vmatprep.subr.mxu0 0.0
    %308 = vmatpush1.xpose.msra.mxu0 0.0
    %309 = vmatprep.subr.mxu0 0.0
    %310 = vmatpush1.xpose.msra.mxu0 0.0
    %311 = vmatprep.subr.mxu0 0.0
    %312 = vmatpush1.xpose.msra.mxu0 0.0
    %313 = vmatprep.subr.mxu0 0.0
    %314 = vmatpush1.xpose.msra.mxu0 0.0
    %315 = vmatprep.subr.mxu0 0.0
    %316 = vmatpush1.xpose.msra.mxu0 0.0
    %317 = vmatprep.subr.mxu0 0.0
    %318 = vmatpush1.xpose.msra.mxu0 0.0
    %319 = vmatprep.subr.mxu0 0.0
    %320 = vmatpush1.xpose.msra.mxu0 0.0
    %321 = vmatprep.subr.mxu0 0.0
    %322 = vmatpush1.xpose.msra.mxu0 0.0
    %323 = vmatprep.subr.mxu0 0.0
    %324 = vmatpush1.xpose.msra.mxu0 0.0
    %325 = vmatprep.subr.mxu0 0.0
    %326 = vmatpush1.xpose.msra.mxu0 0.0
    %327 = vmatprep.subr.mxu0 0.0
    %328 = vmatpush1.xpose.msra.mxu0 0.0
    %329 = vmatprep.subr.mxu0 0.0
    %330 = vmatpush1.xpose.msra.mxu0 0.0
    %331 = vmatprep.subr.mxu0 0.0
    %332 = vmatpush1.xpose.msra.mxu0 0.0
    %333 = vmatprep.subr.mxu0 0.0
    %334 = vmatpush1.xpose.msra.mxu0 0.0
    %335 = vmatprep.subr.mxu0 0.0
    %336 = vmatpush1.xpose.msra.mxu0 0.0
    %337 = vmatprep.subr.mxu0 0.0
    %338 = vmatpush1.xpose.msra.mxu0 0.0
    %339 = vmatprep.subr.mxu0 0.0
    %340 = vmatpush1.xpose.msra.mxu0 0.0
    %341 = vmatprep.subr.mxu0 0.0
    %342 = vmatpush1.xpose.msra.mxu0 0.0
    %343 = vmatprep.subr.mxu0 0.0
    %344 = vmatpush1.xpose.msra.mxu0 0.0
    %345 = vmatprep.subr.mxu0 0.0
    %346 = vmatpush1.xpose.msra.mxu0 0.0
    %347 = vmatprep.subr.mxu0 0.0
    %348 = vmatpush1.xpose.msra.mxu0 0.0
    %349 = vmatprep.subr.mxu0 0.0
    %350 = vmatpush1.xpose.msra.mxu0 0.0
    %351 = vmatprep.subr.mxu0 0.0
    %352 = vmatpush1.xpose.msra.mxu0 0.0
    %353 = vmatprep.subr.mxu0 0.0
    %354 = vmatpush1.xpose.msra.mxu0 0.0
    %355 = vmatprep.subr.mxu0 0.0
    %356 = vmatpush1.xpose.msra.mxu0 0.0
    %357 = vmatprep.subr.mxu0 0.0
    %358 = vmatpush1.xpose.msra.mxu0 0.0
    %359 = vmatprep.subr.mxu0 0.0
    %360 = vmatpush1.xpose.msra.mxu0 0.0
    %361 = vmatprep.subr.mxu0 0.0
    %362 = vmatpush1.xpose.msra.mxu0 0.0
    %363 = vmatprep.subr.mxu0 0.0
    %364 = vmatpush1.xpose.msra.mxu0 0.0
    %365 = vmatprep.subr.mxu0 0.0
    %366 = vmatpush1.xpose.msra.mxu0 0.0
    %367 = vmatprep.subr.mxu0 0.0
    %368 = vmatpush1.xpose.msra.mxu0 0.0
    %369 = vmatprep.mubr.f32.mxu0 0.0
    %370 = vmatmul.mubr.f32.gmra.mrb[0].mxu0 %v301
    %v371 = vpop.f32.mrb[0].mxu0
    %v372 = vadd.f32 0.0, %v371
    %v373 = vpop.f32.mrb[0].mxu0
    %374 = vdwg.mxu0
    %v375 = vmul.f32 %v372, 0.35355338
    %v376 = vsel %vm134, %v375, -inf
    %377 = vmax.xlane.f32.xlu0 %v376
    %v378 = vpop.xlane.xlu0 %377
    %v379 = vsub.f32 %v375, %v378
    %v380 = vmul.f32 %v379, 1.442695
    %v381 = vpow.pop %v380
    %v382 = vsel %vm134, %v381, 0.0
    %383 = vadd.xlane.f32.xlu0 %v382
    %v384 = vpop.xlane.xlu0 %383
    %v385 = vrcp.pop %v384
    %v386 = vmul.f32 %v381, %v385
    %387 = vrot.lane.b32.xlu0 %v123, 56
    %v388 = vpop.permute.xlu0 %387
    %v391 = vsel %vm134, %v386, 0
    %393 = vmatprep.subr.mxu0 0.0
    %394 = vmatpush1.msra.mxu0 %v388
    %395 = vmatprep.subr.mxu0 0.0
    %396 = vmatpush1.msra.mxu0 0.0
    %397 = vmatprep.subr.mxu0 0.0
    %398 = vmatpush1.msra.mxu0 0.0
    %399 = vmatprep.subr.mxu0 0.0
    %400 = vmatpush1.msra.mxu0 0.0
    %401 = vmatprep.subr.mxu0 0.0
    %402 = vmatpush1.msra.mxu0 0.0
    %403 = vmatprep.subr.mxu0 0.0
    %404 = vmatpush1.msra.mxu0 0.0
    %405 = vmatprep.subr.mxu0 0.0
    %406 = vmatpush1.msra.mxu0 0.0
    %407 = vmatprep.subr.mxu0 0.0
    %408 = vmatpush1.msra.mxu0 0.0
    %409 = vmatprep.subr.mxu0 0.0
    %410 = vmatpush1.msra.mxu0 0.0
    %411 = vmatprep.subr.mxu0 0.0
    %412 = vmatpush1.msra.mxu0 0.0
    %413 = vmatprep.subr.mxu0 0.0
    %414 = vmatpush1.msra.mxu0 0.0
    %415 = vmatprep.subr.mxu0 0.0
    %416 = vmatpush1.msra.mxu0 0.0
    %417 = vmatprep.subr.mxu0 0.0
    %418 = vmatpush1.msra.mxu0 0.0
    %419 = vmatprep.subr.mxu0 0.0
    %420 = vmatpush1.msra.mxu0 0.0
    %421 = vmatprep.subr.mxu0 0.0
    %422 = vmatpush1.msra.mxu0 0.0
    %423 = vmatprep.subr.mxu0 0.0
    %424 = vmatpush1.msra.mxu0 0.0
    %425 = vmatprep.subr.mxu0 0.0
    %426 = vmatpush1.msra.mxu0 0.0
    %427 = vmatprep.subr.mxu0 0.0
    %428 = vmatpush1.msra.mxu0 0.0
    %429 = vmatprep.subr.mxu0 0.0
    %430 = vmatpush1.msra.mxu0 0.0
    %431 = vmatprep.subr.mxu0 0.0
    %432 = vmatpush1.msra.mxu0 0.0
    %433 = vmatprep.subr.mxu0 0.0
    %434 = vmatpush1.msra.mxu0 0.0
    %435 = vmatprep.subr.mxu0 0.0
    %436 = vmatpush1.msra.mxu0 0.0
    %437 = vmatprep.subr.mxu0 0.0
    %438 = vmatpush1.msra.mxu0 0.0
    %439 = vmatprep.subr.mxu0 0.0
    %440 = vmatpush1.msra.mxu0 0.0
    %441 = vmatprep.subr.mxu0 0.0
    %442 = vmatpush1.msra.mxu0 0.0
    %443 = vmatprep.subr.mxu0 0.0
    %444 = vmatpush1.msra.mxu0 0.0
    %445 = vmatprep.subr.mxu0 0.0
    %446 = vmatpush1.msra.mxu0 0.0
    %447 = vmatprep.subr.mxu0 0.0
    %448 = vmatpush1.msra.mxu0 0.0
    %449 = vmatprep.subr.mxu0 0.0
    %450 = vmatpush1.msra.mxu0 0.0
    %451 = vmatprep.subr.mxu0 0.0
    %452 = vmatpush1.msra.mxu0 0.0
    %453 = vmatprep.subr.mxu0 0.0
    %454 = vmatpush1.msra.mxu0 0.0
    %455 = vmatprep.subr.mxu0 0.0
    %456 = vmatpush1.msra.mxu0 0.0
    %457 = vmatprep.mubr.f32.mxu0 0.0
    %458 = vmatmul.mubr.f32.gmra.mrb[0].mxu0 %v391
    %v459 = vpop.f32.mrb[0].mxu0
    %v460 = vadd.f32 0.0, %v459
    %v461 = vpop.f32.mrb[0].mxu0
    %462 = vdwg.mxu0
    %463 = vrot.lane.b32.xlu0 %v123, 112
    %v464 = vpop.permute.xlu0 %463
    %465 = vrot.lane.b32.xlu0 %v123, 80
    %v466 = vpop.permute.xlu0 %465
    %v467 = vsel %vm134, %v464, 0
    %v469 = vsel %vm134, %v466, 0
    %471 = vmatprep.subr.mxu0 0.0
    %472 = vmatpush1.xpose.msra.mxu0 %v469
    %473 = vmatprep.subr.mxu0 0.0
    %474 = vmatpush1.xpose.msra.mxu0 0.0
    %475 = vmatprep.subr.mxu0 0.0
    %476 = vmatpush1.xpose.msra.mxu0 0.0
    %477 = vmatprep.subr.mxu0 0.0
    %478 = vmatpush1.xpose.msra.mxu0 0.0
    %479 = vmatprep.subr.mxu0 0.0
    %480 = vmatpush1.xpose.msra.mxu0 0.0
    %481 = vmatprep.subr.mxu0 0.0
    %482 = vmatpush1.xpose.msra.mxu0 0.0
    %483 = vmatprep.subr.mxu0 0.0
    %484 = vmatpush1.xpose.msra.mxu0 0.0
    %485 = vmatprep.subr.mxu0 0.0
    %486 = vmatpush1.xpose.msra.mxu0 0.0
    %487 = vmatprep.subr.mxu0 0.0
    %488 = vmatpush1.xpose.msra.mxu0 0.0
    %489 = vmatprep.subr.mxu0 0.0
    %490 = vmatpush1.xpose.msra.mxu0 0.0
    %491 = vmatprep.subr.mxu0 0.0
    %492 = vmatpush1.xpose.msra.mxu0 0.0
    %493 = vmatprep.subr.mxu0 0.0
    %494 = vmatpush1.xpose.msra.mxu0 0.0
    %495 = vmatprep.subr.mxu0 0.0
    %496 = vmatpush1.xpose.msra.mxu0 0.0
    %497 = vmatprep.subr.mxu0 0.0
    %498 = vmatpush1.xpose.msra.mxu0 0.0
    %499 = vmatprep.subr.mxu0 0.0
    %500 = vmatpush1.xpose.msra.mxu0 0.0
    %501 = vmatprep.subr.mxu0 0.0
    %502 = vmatpush1.xpose.msra.mxu0 0.0
    %503 = vmatprep.subr.mxu0 0.0
    %504 = vmatpush1.xpose.msra.mxu0 0.0
    %505 = vmatprep.subr.mxu0 0.0
    %506 = vmatpush1.xpose.msra.mxu0 0.0
    %507 = vmatprep.subr.mxu0 0.0
    %508 = vmatpush1.xpose.msra.mxu0 0.0
    %509 = vmatprep.subr.mxu0 0.0
    %510 = vmatpush1.xpose.msra.mxu0 0.0
    %511 = vmatprep.subr.mxu0 0.0
    %512 = vmatpush1.xpose.msra.mxu0 0.0
    %513 = vmatprep.subr.mxu0 0.0
    %514 = vmatpush1.xpose.msra.mxu0 0.0
    %515 = vmatprep.subr.mxu0 0.0
    %516 = vmatpush1.xpose.msra.mxu0 0.0
    %517 = vmatprep.subr.mxu0 0.0
    %518 = vmatpush1.xpose.msra.mxu0 0.0
    %519 = vmatprep.subr.mxu0 0.0
    %520 = vmatpush1.xpose.msra.mxu0 0.0
    %521 = vmatprep.subr.mxu0 0.0
    %522 = vmatpush1.xpose.msra.mxu0 0.0
    %523 = vmatprep.subr.mxu0 0.0
    %524 = vmatpush1.xpose.msra.mxu0 0.0
    %525 = vmatprep.subr.mxu0 0.0
    %526 = vmatpush1.xpose.msra.mxu0 0.0
    %527 = vmatprep.subr.mxu0 0.0
    %528 = vmatpush1.xpose.msra.mxu0 0.0
    %529 = vmatprep.subr.mxu0 0.0
    %530 = vmatpush1.xpose.msra.mxu0 0.0
    %531 = vmatprep.subr.mxu0 0.0
    %532 = vmatpush1.xpose.msra.mxu0 0.0
    %533 = vmatprep.subr.mxu0 0.0
    %534 = vmatpush1.xpose.msra.mxu0 0.0
    %535 = vmatprep.mubr.f32.mxu0 0.0
    %536 = vmatmul.mubr.f32.gmra.mrb[0].mxu0 %v467
    %v537 = vpop.f32.mrb[0].mxu0
    %v538 = vadd.f32 0.0, %v537
    %v539 = vpop.f32.mrb[0].mxu0
    %540 = vdwg.mxu0
    %v541 = vmul.f32 %v538, 0.35355338
    %v542 = vsel %vm134, %v541, -inf
    %543 = vmax.xlane.f32.xlu0 %v542
    %v544 = vpop.xlane.xlu0 %543
    %v545 = vsub.f32 %v541, %v544
    %v546 = vmul.f32 %v545, 1.442695
    %v547 = vpow.pop %v546
    %v548 = vsel %vm134, %v547, 0.0
    %549 = vadd.xlane.f32.xlu0 %v548
    %v550 = vpop.xlane.xlu0 %549
    %v551 = vrcp.pop %v550
    %v552 = vmul.f32 %v547, %v551
    %553 = vrot.lane.b32.xlu0 %v123, 48
    %v554 = vpop.permute.xlu0 %553
    %v557 = vsel %vm134, %v552, 0
    %559 = vmatprep.subr.mxu0 0.0
    %560 = vmatpush1.msra.mxu0 %v554
    %561 = vmatprep.subr.mxu0 0.0
    %562 = vmatpush1.msra.mxu0 0.0
    %563 = vmatprep.subr.mxu0 0.0
    %564 = vmatpush1.msra.mxu0 0.0
    %565 = vmatprep.subr.mxu0 0.0
    %566 = vmatpush1.msra.mxu0 0.0
    %567 = vmatprep.subr.mxu0 0.0
    %568 = vmatpush1.msra.mxu0 0.0
    %569 = vmatprep.subr.mxu0 0.0
    %570 = vmatpush1.msra.mxu0 0.0
    %571 = vmatprep.subr.mxu0 0.0
    %572 = vmatpush1.msra.mxu0 0.0
    %573 = vmatprep.subr.mxu0 0.0
    %574 = vmatpush1.msra.mxu0 0.0
    %575 = vmatprep.subr.mxu0 0.0
    %576 = vmatpush1.msra.mxu0 0.0
    %577 = vmatprep.subr.mxu0 0.0
    %578 = vmatpush1.msra.mxu0 0.0
    %579 = vmatprep.subr.mxu0 0.0
    %580 = vmatpush1.msra.mxu0 0.0
    %581 = vmatprep.subr.mxu0 0.0
    %582 = vmatpush1.msra.mxu0 0.0
    %583 = vmatprep.subr.mxu0 0.0
    %584 = vmatpush1.msra.mxu0 0.0
    %585 = vmatprep.subr.mxu0 0.0
    %586 = vmatpush1.msra.mxu0 0.0
    %587 = vmatprep.subr.mxu0 0.0
    %588 = vmatpush1.msra.mxu0 0.0
    %589 = vmatprep.subr.mxu0 0.0
    %590 = vmatpush1.msra.mxu0 0.0
    %591 = vmatprep.subr.mxu0 0.0
    %592 = vmatpush1.msra.mxu0 0.0
    %593 = vmatprep.subr.mxu0 0.0
    %594 = vmatpush1.msra.mxu0 0.0
    %595 = vmatprep.subr.mxu0 0.0
    %596 = vmatpush1.msra.mxu0 0.0
    %597 = vmatprep.subr.mxu0 0.0
    %598 = vmatpush1.msra.mxu0 0.0
    %599 = vmatprep.subr.mxu0 0.0
    %600 = vmatpush1.msra.mxu0 0.0
    %601 = vmatprep.subr.mxu0 0.0
    %602 = vmatpush1.msra.mxu0 0.0
    %603 = vmatprep.subr.mxu0 0.0
    %604 = vmatpush1.msra.mxu0 0.0
    %605 = vmatprep.subr.mxu0 0.0
    %606 = vmatpush1.msra.mxu0 0.0
    %607 = vmatprep.subr.mxu0 0.0
    %608 = vmatpush1.msra.mxu0 0.0
    %609 = vmatprep.subr.mxu0 0.0
    %610 = vmatpush1.msra.mxu0 0.0
    %611 = vmatprep.subr.mxu0 0.0
    %612 = vmatpush1.msra.mxu0 0.0
    %613 = vmatprep.subr.mxu0 0.0
    %614 = vmatpush1.msra.mxu0 0.0
    %615 = vmatprep.subr.mxu0 0.0
    %616 = vmatpush1.msra.mxu0 0.0
    %617 = vmatprep.subr.mxu0 0.0
    %618 = vmatpush1.msra.mxu0 0.0
    %619 = vmatprep.subr.mxu0 0.0
    %620 = vmatpush1.msra.mxu0 0.0
    %621 = vmatprep.subr.mxu0 0.0
    %622 = vmatpush1.msra.mxu0 0.0
    %623 = vmatprep.mubr.f32.mxu0 0.0
    %624 = vmatmul.mubr.f32.gmra.mrb[0].mxu0 %v557
    %v625 = vpop.f32.mrb[0].mxu0
    %v626 = vadd.f32 0.0, %v625
    %v627 = vpop.f32.mrb[0].mxu0
    %628 = vdwg.mxu0
    %629 = vrot.lane.b32.xlu0 %v123, 104
    %v630 = vpop.permute.xlu0 %629
    %631 = vrot.lane.b32.xlu0 %v123, 72
    %v632 = vpop.permute.xlu0 %631
    %v633 = vsel %vm134, %v630, 0
    %v635 = vsel %vm134, %v632, 0
    %637 = vmatprep.subr.mxu0 0.0
    %638 = vmatpush1.xpose.msra.mxu0 %v635
    %639 = vmatprep.subr.mxu0 0.0
    %640 = vmatpush1.xpose.msra.mxu0 0.0
    %641 = vmatprep.subr.mxu0 0.0
    %642 = vmatpush1.xpose.msra.mxu0 0.0
    %643 = vmatprep.subr.mxu0 0.0
    %644 = vmatpush1.xpose.msra.mxu0 0.0
    %645 = vmatprep.subr.mxu0 0.0
    %646 = vmatpush1.xpose.msra.mxu0 0.0
    %647 = vmatprep.subr.mxu0 0.0
    %648 = vmatpush1.xpose.msra.mxu0 0.0
    %649 = vmatprep.subr.mxu0 0.0
    %650 = vmatpush1.xpose.msra.mxu0 0.0
    %651 = vmatprep.subr.mxu0 0.0
    %652 = vmatpush1.xpose.msra.mxu0 0.0
    %653 = vmatprep.subr.mxu0 0.0
    %654 = vmatpush1.xpose.msra.mxu0 0.0
    %655 = vmatprep.subr.mxu0 0.0
    %656 = vmatpush1.xpose.msra.mxu0 0.0
    %657 = vmatprep.subr.mxu0 0.0
    %658 = vmatpush1.xpose.msra.mxu0 0.0
    %659 = vmatprep.subr.mxu0 0.0
    %660 = vmatpush1.xpose.msra.mxu0 0.0
    %661 = vmatprep.subr.mxu0 0.0
    %662 = vmatpush1.xpose.msra.mxu0 0.0
    %663 = vmatprep.subr.mxu0 0.0
    %664 = vmatpush1.xpose.msra.mxu0 0.0
    %665 = vmatprep.subr.mxu0 0.0
    %666 = vmatpush1.xpose.msra.mxu0 0.0
    %667 = vmatprep.subr.mxu0 0.0
    %668 = vmatpush1.xpose.msra.mxu0 0.0
    %669 = vmatprep.subr.mxu0 0.0
    %670 = vmatpush1.xpose.msra.mxu0 0.0
    %671 = vmatprep.subr.mxu0 0.0
    %672 = vmatpush1.xpose.msra.mxu0 0.0
    %673 = vmatprep.subr.mxu0 0.0
    %674 = vmatpush1.xpose.msra.mxu0 0.0
    %675 = vmatprep.subr.mxu0 0.0
    %676 = vmatpush1.xpose.msra.mxu0 0.0
    %677 = vmatprep.subr.mxu0 0.0
    %678 = vmatpush1.xpose.msra.mxu0 0.0
    %679 = vmatprep.subr.mxu0 0.0
    %680 = vmatpush1.xpose.msra.mxu0 0.0
    %681 = vmatprep.subr.mxu0 0.0
    %682 = vmatpush1.xpose.msra.mxu0 0.0
    %683 = vmatprep.subr.mxu0 0.0
    %684 = vmatpush1.xpose.msra.mxu0 0.0
    %685 = vmatprep.subr.mxu0 0.0
    %686 = vmatpush1.xpose.msra.mxu0 0.0
    %687 = vmatprep.subr.mxu0 0.0
    %688 = vmatpush1.xpose.msra.mxu0 0.0
    %689 = vmatprep.subr.mxu0 0.0
    %690 = vmatpush1.xpose.msra.mxu0 0.0
    %691 = vmatprep.subr.mxu0 0.0
    %692 = vmatpush1.xpose.msra.mxu0 0.0
    %693 = vmatprep.subr.mxu0 0.0
    %694 = vmatpush1.xpose.msra.mxu0 0.0
    %695 = vmatprep.subr.mxu0 0.0
    %696 = vmatpush1.xpose.msra.mxu0 0.0
    %697 = vmatprep.subr.mxu0 0.0
    %698 = vmatpush1.xpose.msra.mxu0 0.0
    %699 = vmatprep.subr.mxu0 0.0
    %700 = vmatpush1.xpose.msra.mxu0 0.0
    %701 = vmatprep.mubr.f32.mxu0 0.0
    %702 = vmatmul.mubr.f32.gmra.mrb[0].mxu0 %v633
    %v703 = vpop.f32.mrb[0].mxu0
    %v704 = vadd.f32 0.0, %v703
    %v705 = vpop.f32.mrb[0].mxu0
    %706 = vdwg.mxu0
    %v707 = vmul.f32 %v704, 0.35355338
    %v708 = vsel %vm134, %v707, -inf
    %709 = vmax.xlane.f32.xlu0 %v708
    %v710 = vpop.xlane.xlu0 %709
    %v711 = vsub.f32 %v707, %v710
    %v712 = vmul.f32 %v711, 1.442695
    %v713 = vpow.pop %v712
    %v714 = vsel %vm134, %v713, 0.0
    %715 = vadd.xlane.f32.xlu0 %v714
    %v716 = vpop.xlane.xlu0 %715
    %v717 = vrcp.pop %v716
    %v718 = vmul.f32 %v713, %v717
    %719 = vrot.lane.b32.xlu0 %v123, 40
    %v720 = vpop.permute.xlu0 %719
    %v723 = vsel %vm134, %v718, 0
    %725 = vmatprep.subr.mxu0 0.0
    %726 = vmatpush1.msra.mxu0 %v720
    %727 = vmatprep.subr.mxu0 0.0
    %728 = vmatpush1.msra.mxu0 0.0
    %729 = vmatprep.subr.mxu0 0.0
    %730 = vmatpush1.msra.mxu0 0.0
    %731 = vmatprep.subr.mxu0 0.0
    %732 = vmatpush1.msra.mxu0 0.0
    %733 = vmatprep.subr.mxu0 0.0
    %734 = vmatpush1.msra.mxu0 0.0
    %735 = vmatprep.subr.mxu0 0.0
    %736 = vmatpush1.msra.mxu0 0.0
    %737 = vmatprep.subr.mxu0 0.0
    %738 = vmatpush1.msra.mxu0 0.0
    %739 = vmatprep.subr.mxu0 0.0
    %740 = vmatpush1.msra.mxu0 0.0
    %741 = vmatprep.subr.mxu0 0.0
    %742 = vmatpush1.msra.mxu0 0.0
    %743 = vmatprep.subr.mxu0 0.0
    %744 = vmatpush1.msra.mxu0 0.0
    %745 = vmatprep.subr.mxu0 0.0
    %746 = vmatpush1.msra.mxu0 0.0
    %747 = vmatprep.subr.mxu0 0.0
    %748 = vmatpush1.msra.mxu0 0.0
    %749 = vmatprep.subr.mxu0 0.0
    %750 = vmatpush1.msra.mxu0 0.0
    %751 = vmatprep.subr.mxu0 0.0
    %752 = vmatpush1.msra.mxu0 0.0
    %753 = vmatprep.subr.mxu0 0.0
    %754 = vmatpush1.msra.mxu0 0.0
    %755 = vmatprep.subr.mxu0 0.0
    %756 = vmatpush1.msra.mxu0 0.0
    %757 = vmatprep.subr.mxu0 0.0
    %758 = vmatpush1.msra.mxu0 0.0
    %759 = vmatprep.subr.mxu0 0.0
    %760 = vmatpush1.msra.mxu0 0.0
    %761 = vmatprep.subr.mxu0 0.0
    %762 = vmatpush1.msra.mxu0 0.0
    %763 = vmatprep.subr.mxu0 0.0
    %764 = vmatpush1.msra.mxu0 0.0
    %765 = vmatprep.subr.mxu0 0.0
    %766 = vmatpush1.msra.mxu0 0.0
    %767 = vmatprep.subr.mxu0 0.0
    %768 = vmatpush1.msra.mxu0 0.0
    %769 = vmatprep.subr.mxu0 0.0
    %770 = vmatpush1.msra.mxu0 0.0
    %771 = vmatprep.subr.mxu0 0.0
    %772 = vmatpush1.msra.mxu0 0.0
    %773 = vmatprep.subr.mxu0 0.0
    %774 = vmatpush1.msra.mxu0 0.0
    %775 = vmatprep.subr.mxu0 0.0
    %776 = vmatpush1.msra.mxu0 0.0
    %777 = vmatprep.subr.mxu0 0.0
    %778 = vmatpush1.msra.mxu0 0.0
    %779 = vmatprep.subr.mxu0 0.0
    %780 = vmatpush1.msra.mxu0 0.0
    %781 = vmatprep.subr.mxu0 0.0
    %782 = vmatpush1.msra.mxu0 0.0
    %783 = vmatprep.subr.mxu0 0.0
    %784 = vmatpush1.msra.mxu0 0.0
    %785 = vmatprep.subr.mxu0 0.0
    %786 = vmatpush1.msra.mxu0 0.0
    %787 = vmatprep.subr.mxu0 0.0
    %788 = vmatpush1.msra.mxu0 0.0
    %789 = vmatprep.mubr.f32.mxu0 0.0
    %790 = vmatmul.mubr.f32.gmra.mrb[0].mxu0 %v723
    %v791 = vpop.f32.mrb[0].mxu0
    %v792 = vadd.f32 0.0, %v791
    %v793 = vpop.f32.mrb[0].mxu0
    %794 = vdwg.mxu0
    %796 = vrot.lane.b32.xlu0 %v460, 8
    %v797 = vpop.permute.xlu0 %796
    %800 = vrot.lane.b32.xlu0 %v626, 16
    %v801 = vpop.permute.xlu0 %800
    %804 = vrot.lane.b32.xlu0 %v792, 24
    %v805 = vpop.permute.xlu0 %804
    %v807 = vsel %vm134, %v294, %v797
    %vm808 = vcmask 130048
    %v809 = vsel %vm808, %v807, %v801
    %vm810 = vcmask 195584
    %v811 = vsel %vm810, %v809, %v805
    %813 = vrot.lane.b32.xlu0 %v128, 96
    %v814 = vpop.permute.xlu0 %813
    %v815 = vsel %vm134, %v128, 0
    %v817 = vsel %vm134, %v814, 0
    %819 = vmatprep.subr.mxu0 0.0
    %820 = vmatpush1.xpose.msra.mxu0 %v817
    %821 = vmatprep.subr.mxu0 0.0
    %822 = vmatpush1.xpose.msra.mxu0 0.0
    %823 = vmatprep.subr.mxu0 0.0
    %824 = vmatpush1.xpose.msra.mxu0 0.0
    %825 = vmatprep.subr.mxu0 0.0
    %826 = vmatpush1.xpose.msra.mxu0 0.0
    %827 = vmatprep.subr.mxu0 0.0
    %828 = vmatpush1.xpose.msra.mxu0 0.0
    %829 = vmatprep.subr.mxu0 0.0
    %830 = vmatpush1.xpose.msra.mxu0 0.0
    %831 = vmatprep.subr.mxu0 0.0
    %832 = vmatpush1.xpose.msra.mxu0 0.0
    %833 = vmatprep.subr.mxu0 0.0
    %834 = vmatpush1.xpose.msra.mxu0 0.0
    %835 = vmatprep.subr.mxu0 0.0
    %836 = vmatpush1.xpose.msra.mxu0 0.0
    %837 = vmatprep.subr.mxu0 0.0
    %838 = vmatpush1.xpose.msra.mxu0 0.0
    %839 = vmatprep.subr.mxu0 0.0
    %840 = vmatpush1.xpose.msra.mxu0 0.0
    %841 = vmatprep.subr.mxu0 0.0
    %842 = vmatpush1.xpose.msra.mxu0 0.0
    %843 = vmatprep.subr.mxu0 0.0
    %844 = vmatpush1.xpose.msra.mxu0 0.0
    %845 = vmatprep.subr.mxu0 0.0
    %846 = vmatpush1.xpose.msra.mxu0 0.0
    %847 = vmatprep.subr.mxu0 0.0
    %848 = vmatpush1.xpose.msra.mxu0 0.0
    %849 = vmatprep.subr.mxu0 0.0
    %850 = vmatpush1.xpose.msra.mxu0 0.0
    %851 = vmatprep.subr.mxu0 0.0
    %852 = vmatpush1.xpose.msra.mxu0 0.0
    %853 = vmatprep.subr.mxu0 0.0
    %854 = vmatpush1.xpose.msra.mxu0 0.0
    %855 = vmatprep.subr.mxu0 0.0
    %856 = vmatpush1.xpose.msra.mxu0 0.0
    %857 = vmatprep.subr.mxu0 0.0
    %858 = vmatpush1.xpose.msra.mxu0 0.0
    %859 = vmatprep.subr.mxu0 0.0
    %860 = vmatpush1.xpose.msra.mxu0 0.0
    %861 = vmatprep.subr.mxu0 0.0
    %862 = vmatpush1.xpose.msra.mxu0 0.0
    %863 = vmatprep.subr.mxu0 0.0
    %864 = vmatpush1.xpose.msra.mxu0 0.0
    %865 = vmatprep.subr.mxu0 0.0
    %866 = vmatpush1.xpose.msra.mxu0 0.0
    %867 = vmatprep.subr.mxu0 0.0
    %868 = vmatpush1.xpose.msra.mxu0 0.0
    %869 = vmatprep.subr.mxu0 0.0
    %870 = vmatpush1.xpose.msra.mxu0 0.0
    %871 = vmatprep.subr.mxu0 0.0
    %872 = vmatpush1.xpose.msra.mxu0 0.0
    %873 = vmatprep.subr.mxu0 0.0
    %874 = vmatpush1.xpose.msra.mxu0 0.0
    %875 = vmatprep.subr.mxu0 0.0
    %876 = vmatpush1.xpose.msra.mxu0 0.0
    %877 = vmatprep.subr.mxu0 0.0
    %878 = vmatpush1.xpose.msra.mxu0 0.0
    %879 = vmatprep.subr.mxu0 0.0
    %880 = vmatpush1.xpose.msra.mxu0 0.0
    %881 = vmatprep.subr.mxu0 0.0
    %882 = vmatpush1.xpose.msra.mxu0 0.0
    %883 = vmatprep.mubr.f32.mxu0 0.0
    %884 = vmatmul.mubr.f32.gmra.mrb[0].mxu0 %v815
    %v885 = vpop.f32.mrb[0].mxu0
    %v886 = vadd.f32 0.0, %v885
    %v887 = vpop.f32.mrb[0].mxu0
    %888 = vdwg.mxu0
    %v889 = vmul.f32 %v886, 0.35355338
    %v890 = vsel %vm134, %v889, -inf
    %891 = vmax.xlane.f32.xlu0 %v890
    %v892 = vpop.xlane.xlu0 %891
    %v893 = vsub.f32 %v889, %v892
    %v894 = vmul.f32 %v893, 1.442695
    %v895 = vpow.pop %v894
    %v896 = vsel %vm134, %v895, 0.0
    %897 = vadd.xlane.f32.xlu0 %v896
    %v898 = vpop.xlane.xlu0 %897
    %v899 = vrcp.pop %v898
    %v900 = vmul.f32 %v895, %v899
    %901 = vrot.lane.b32.xlu0 %v128, 64
    %v902 = vpop.permute.xlu0 %901
    %v905 = vsel %vm134, %v900, 0
    %907 = vmatprep.subr.mxu0 0.0
    %908 = vmatpush1.msra.mxu0 %v902
    %909 = vmatprep.subr.mxu0 0.0
    %910 = vmatpush1.msra.mxu0 0.0
    %911 = vmatprep.subr.mxu0 0.0
    %912 = vmatpush1.msra.mxu0 0.0
    %913 = vmatprep.subr.mxu0 0.0
    %914 = vmatpush1.msra.mxu0 0.0
    %915 = vmatprep.subr.mxu0 0.0
    %916 = vmatpush1.msra.mxu0 0.0
    %917 = vmatprep.subr.mxu0 0.0
    %918 = vmatpush1.msra.mxu0 0.0
    %919 = vmatprep.subr.mxu0 0.0
    %920 = vmatpush1.msra.mxu0 0.0
    %921 = vmatprep.subr.mxu0 0.0
    %922 = vmatpush1.msra.mxu0 0.0
    %923 = vmatprep.subr.mxu0 0.0
    %924 = vmatpush1.msra.mxu0 0.0
    %925 = vmatprep.subr.mxu0 0.0
    %926 = vmatpush1.msra.mxu0 0.0
    %927 = vmatprep.subr.mxu0 0.0
    %928 = vmatpush1.msra.mxu0 0.0
    %929 = vmatprep.subr.mxu0 0.0
    %930 = vmatpush1.msra.mxu0 0.0
    %931 = vmatprep.subr.mxu0 0.0
    %932 = vmatpush1.msra.mxu0 0.0
    %933 = vmatprep.subr.mxu0 0.0
    %934 = vmatpush1.msra.mxu0 0.0
    %935 = vmatprep.subr.mxu0 0.0
    %936 = vmatpush1.msra.mxu0 0.0
    %937 = vmatprep.subr.mxu0 0.0
    %938 = vmatpush1.msra.mxu0 0.0
    %939 = vmatprep.subr.mxu0 0.0
    %940 = vmatpush1.msra.mxu0 0.0
    %941 = vmatprep.subr.mxu0 0.0
    %942 = vmatpush1.msra.mxu0 0.0
    %943 = vmatprep.subr.mxu0 0.0
    %944 = vmatpush1.msra.mxu0 0.0
    %945 = vmatprep.subr.mxu0 0.0
    %946 = vmatpush1.msra.mxu0 0.0
    %947 = vmatprep.subr.mxu0 0.0
    %948 = vmatpush1.msra.mxu0 0.0
    %949 = vmatprep.subr.mxu0 0.0
    %950 = vmatpush1.msra.mxu0 0.0
    %951 = vmatprep.subr.mxu0 0.0
    %952 = vmatpush1.msra.mxu0 0.0
    %953 = vmatprep.subr.mxu0 0.0
    %954 = vmatpush1.msra.mxu0 0.0
    %955 = vmatprep.subr.mxu0 0.0
    %956 = vmatpush1.msra.mxu0 0.0
    %957 = vmatprep.subr.mxu0 0.0
    %958 = vmatpush1.msra.mxu0 0.0
    %959 = vmatprep.subr.mxu0 0.0
    %960 = vmatpush1.msra.mxu0 0.0
    %961 = vmatprep.subr.mxu0 0.0
    %962 = vmatpush1.msra.mxu0 0.0
    %963 = vmatprep.subr.mxu0 0.0
    %964 = vmatpush1.msra.mxu0 0.0
    %965 = vmatprep.subr.mxu0 0.0
    %966 = vmatpush1.msra.mxu0 0.0
    %967 = vmatprep.subr.mxu0 0.0
    %968 = vmatpush1.msra.mxu0 0.0
    %969 = vmatprep.subr.mxu0 0.0
    %970 = vmatpush1.msra.mxu0 0.0
    %971 = vmatprep.mubr.f32.mxu0 0.0
    %972 = vmatmul.mubr.f32.gmra.mrb[0].mxu0 %v905
    %v973 = vpop.f32.mrb[0].mxu0
    %v974 = vadd.f32 0.0, %v973
    %v975 = vpop.f32.mrb[0].mxu0
    %976 = vdwg.mxu0
    %977 = vrot.lane.b32.xlu0 %v128, 120
    %v978 = vpop.permute.xlu0 %977
    %979 = vrot.lane.b32.xlu0 %v128, 88
    %v980 = vpop.permute.xlu0 %979
    %v981 = vsel %vm134, %v978, 0
    %v983 = vsel %vm134, %v980, 0
    %985 = vmatprep.subr.mxu0 0.0
    %986 = vmatpush1.xpose.msra.mxu0 %v983
    %987 = vmatprep.subr.mxu0 0.0
    %988 = vmatpush1.xpose.msra.mxu0 0.0
    %989 = vmatprep.subr.mxu0 0.0
    %990 = vmatpush1.xpose.msra.mxu0 0.0
    %991 = vmatprep.subr.mxu0 0.0
    %992 = vmatpush1.xpose.msra.mxu0 0.0
    %993 = vmatprep.subr.mxu0 0.0
    %994 = vmatpush1.xpose.msra.mxu0 0.0
    %995 = vmatprep.subr.mxu0 0.0
    %996 = vmatpush1.xpose.msra.mxu0 0.0
    %997 = vmatprep.subr.mxu0 0.0
    %998 = vmatpush1.xpose.msra.mxu0 0.0
    %999 = vmatprep.subr.mxu0 0.0
    %1000 = vmatpush1.xpose.msra.mxu0 0.0
    %1001 = vmatprep.subr.mxu0 0.0
    %1002 = vmatpush1.xpose.msra.mxu0 0.0
    %1003 = vmatprep.subr.mxu0 0.0
    %1004 = vmatpush1.xpose.msra.mxu0 0.0
    %1005 = vmatprep.subr.mxu0 0.0
    %1006 = vmatpush1.xpose.msra.mxu0 0.0
    %1007 = vmatprep.subr.mxu0 0.0
    %1008 = vmatpush1.xpose.msra.mxu0 0.0
    %1009 = vmatprep.subr.mxu0 0.0
    %1010 = vmatpush1.xpose.msra.mxu0 0.0
    %1011 = vmatprep.subr.mxu0 0.0
    %1012 = vmatpush1.xpose.msra.mxu0 0.0
    %1013 = vmatprep.subr.mxu0 0.0
    %1014 = vmatpush1.xpose.msra.mxu0 0.0
    %1015 = vmatprep.subr.mxu0 0.0
    %1016 = vmatpush1.xpose.msra.mxu0 0.0
    %1017 = vmatprep.subr.mxu0 0.0
    %1018 = vmatpush1.xpose.msra.mxu0 0.0
    %1019 = vmatprep.subr.mxu0 0.0
    %1020 = vmatpush1.xpose.msra.mxu0 0.0
    %1021 = vmatprep.subr.mxu0 0.0
    %1022 = vmatpush1.xpose.msra.mxu0 0.0
    %1023 = vmatprep.subr.mxu0 0.0
    %1024 = vmatpush1.xpose.msra.mxu0 0.0
    %1025 = vmatprep.subr.mxu0 0.0
    %1026 = vmatpush1.xpose.msra.mxu0 0.0
    %1027 = vmatprep.subr.mxu0 0.0
    %1028 = vmatpush1.xpose.msra.mxu0 0.0
    %1029 = vmatprep.subr.mxu0 0.0
    %1030 = vmatpush1.xpose.msra.mxu0 0.0
    %1031 = vmatprep.subr.mxu0 0.0
    %1032 = vmatpush1.xpose.msra.mxu0 0.0
    %1033 = vmatprep.subr.mxu0 0.0
    %1034 = vmatpush1.xpose.msra.mxu0 0.0
    %1035 = vmatprep.subr.mxu0 0.0
    %1036 = vmatpush1.xpose.msra.mxu0 0.0
    %1037 = vmatprep.subr.mxu0 0.0
    %1038 = vmatpush1.xpose.msra.mxu0 0.0
    %1039 = vmatprep.subr.mxu0 0.0
    %1040 = vmatpush1.xpose.msra.mxu0 0.0
    %1041 = vmatprep.subr.mxu0 0.0
    %1042 = vmatpush1.xpose.msra.mxu0 0.0
    %1043 = vmatprep.subr.mxu0 0.0
    %1044 = vmatpush1.xpose.msra.mxu0 0.0
    %1045 = vmatprep.subr.mxu0 0.0
    %1046 = vmatpush1.xpose.msra.mxu0 0.0
    %1047 = vmatprep.subr.mxu0 0.0
    %1048 = vmatpush1.xpose.msra.mxu0 0.0
    %1049 = vmatprep.mubr.f32.mxu0 0.0
    %1050 = vmatmul.mubr.f32.gmra.mrb[0].mxu0 %v981
    %v1051 = vpop.f32.mrb[0].mxu0
    %v1052 = vadd.f32 0.0, %v1051
    %v1053 = vpop.f32.mrb[0].mxu0
    %1054 = vdwg.mxu0
    %v1055 = vmul.f32 %v1052, 0.35355338
    %v1056 = vsel %vm134, %v1055, -inf
    %1057 = vmax.xlane.f32.xlu0 %v1056
    %v1058 = vpop.xlane.xlu0 %1057
    %v1059 = vsub.f32 %v1055, %v1058
    %v1060 = vmul.f32 %v1059, 1.442695
    %v1061 = vpow.pop %v1060
    %v1062 = vsel %vm134, %v1061, 0.0
    %1063 = vadd.xlane.f32.xlu0 %v1062
    %v1064 = vpop.xlane.xlu0 %1063
    %v1065 = vrcp.pop %v1064
    %v1066 = vmul.f32 %v1061, %v1065
    %1067 = vrot.lane.b32.xlu0 %v128, 56
    %v1068 = vpop.permute.xlu0 %1067
    %v1071 = vsel %vm134, %v1066, 0
    %1073 = vmatprep.subr.mxu0 0.0
    %1074 = vmatpush1.msra.mxu0 %v1068
    %1075 = vmatprep.subr.mxu0 0.0
    %1076 = vmatpush1.msra.mxu0 0.0
    %1077 = vmatprep.subr.mxu0 0.0
    %1078 = vmatpush1.msra.mxu0 0.0
    %1079 = vmatprep.subr.mxu0 0.0
    %1080 = vmatpush1.msra.mxu0 0.0
    %1081 = vmatprep.subr.mxu0 0.0
    %1082 = vmatpush1.msra.mxu0 0.0
    %1083 = vmatprep.subr.mxu0 0.0
    %1084 = vmatpush1.msra.mxu0 0.0
    %1085 = vmatprep.subr.mxu0 0.0
    %1086 = vmatpush1.msra.mxu0 0.0
    %1087 = vmatprep.subr.mxu0 0.0
    %1088 = vmatpush1.msra.mxu0 0.0
    %1089 = vmatprep.subr.mxu0 0.0
    %1090 = vmatpush1.msra.mxu0 0.0
    %1091 = vmatprep.subr.mxu0 0.0
    %1092 = vmatpush1.msra.mxu0 0.0
    %1093 = vmatprep.subr.mxu0 0.0
    %1094 = vmatpush1.msra.mxu0 0.0
    %1095 = vmatprep.subr.mxu0 0.0
    %1096 = vmatpush1.msra.mxu0 0.0
    %1097 = vmatprep.subr.mxu0 0.0
    %1098 = vmatpush1.msra.mxu0 0.0
    %1099 = vmatprep.subr.mxu0 0.0
    %1100 = vmatpush1.msra.mxu0 0.0
    %1101 = vmatprep.subr.mxu0 0.0
    %1102 = vmatpush1.msra.mxu0 0.0
    %1103 = vmatprep.subr.mxu0 0.0
    %1104 = vmatpush1.msra.mxu0 0.0
    %1105 = vmatprep.subr.mxu0 0.0
    %1106 = vmatpush1.msra.mxu0 0.0
    %1107 = vmatprep.subr.mxu0 0.0
    %1108 = vmatpush1.msra.mxu0 0.0
    %1109 = vmatprep.subr.mxu0 0.0
    %1110 = vmatpush1.msra.mxu0 0.0
    %1111 = vmatprep.subr.mxu0 0.0
    %1112 = vmatpush1.msra.mxu0 0.0
    %1113 = vmatprep.subr.mxu0 0.0
    %1114 = vmatpush1.msra.mxu0 0.0
    %1115 = vmatprep.subr.mxu0 0.0
    %1116 = vmatpush1.msra.mxu0 0.0
    %1117 = vmatprep.subr.mxu0 0.0
    %1118 = vmatpush1.msra.mxu0 0.0
    %1119 = vmatprep.subr.mxu0 0.0
    %1120 = vmatpush1.msra.mxu0 0.0
    %1121 = vmatprep.subr.mxu0 0.0
    %1122 = vmatpush1.msra.mxu0 0.0
    %1123 = vmatprep.subr.mxu0 0.0
    %1124 = vmatpush1.msra.mxu0 0.0
    %1125 = vmatprep.subr.mxu0 0.0
    %1126 = vmatpush1.msra.mxu0 0.0
    %1127 = vmatprep.subr.mxu0 0.0
    %1128 = vmatpush1.msra.mxu0 0.0
    %1129 = vmatprep.subr.mxu0 0.0
    %1130 = vmatpush1.msra.mxu0 0.0
    %1131 = vmatprep.subr.mxu0 0.0
    %1132 = vmatpush1.msra.mxu0 0.0
    %1133 = vmatprep.subr.mxu0 0.0
    %1134 = vmatpush1.msra.mxu0 0.0
    %1135 = vmatprep.subr.mxu0 0.0
    %1136 = vmatpush1.msra.mxu0 0.0
    %1137 = vmatprep.mubr.f32.mxu0 0.0
    %1138 = vmatmul.mubr.f32.gmra.mrb[0].mxu0 %v1071
    %v1139 = vpop.f32.mrb[0].mxu0
    %v1140 = vadd.f32 0.0, %v1139
    %v1141 = vpop.f32.mrb[0].mxu0
    %1142 = vdwg.mxu0
    %1143 = vrot.lane.b32.xlu0 %v128, 112
    %v1144 = vpop.permute.xlu0 %1143
    %1145 = vrot.lane.b32.xlu0 %v128, 80
    %v1146 = vpop.permute.xlu0 %1145
    %v1147 = vsel %vm134, %v1144, 0
    %v1149 = vsel %vm134, %v1146, 0
    %1151 = vmatprep.subr.mxu0 0.0
    %1152 = vmatpush1.xpose.msra.mxu0 %v1149
    %1153 = vmatprep.subr.mxu0 0.0
    %1154 = vmatpush1.xpose.msra.mxu0 0.0
    %1155 = vmatprep.subr.mxu0 0.0
    %1156 = vmatpush1.xpose.msra.mxu0 0.0
    %1157 = vmatprep.subr.mxu0 0.0
    %1158 = vmatpush1.xpose.msra.mxu0 0.0
    %1159 = vmatprep.subr.mxu0 0.0
    %1160 = vmatpush1.xpose.msra.mxu0 0.0
    %1161 = vmatprep.subr.mxu0 0.0
    %1162 = vmatpush1.xpose.msra.mxu0 0.0
    %1163 = vmatprep.subr.mxu0 0.0
    %1164 = vmatpush1.xpose.msra.mxu0 0.0
    %1165 = vmatprep.subr.mxu0 0.0
    %1166 = vmatpush1.xpose.msra.mxu0 0.0
    %1167 = vmatprep.subr.mxu0 0.0
    %1168 = vmatpush1.xpose.msra.mxu0 0.0
    %1169 = vmatprep.subr.mxu0 0.0
    %1170 = vmatpush1.xpose.msra.mxu0 0.0
    %1171 = vmatprep.subr.mxu0 0.0
    %1172 = vmatpush1.xpose.msra.mxu0 0.0
    %1173 = vmatprep.subr.mxu0 0.0
    %1174 = vmatpush1.xpose.msra.mxu0 0.0
    %1175 = vmatprep.subr.mxu0 0.0
    %1176 = vmatpush1.xpose.msra.mxu0 0.0
    %1177 = vmatprep.subr.mxu0 0.0
    %1178 = vmatpush1.xpose.msra.mxu0 0.0
    %1179 = vmatprep.subr.mxu0 0.0
    %1180 = vmatpush1.xpose.msra.mxu0 0.0
    %1181 = vmatprep.subr.mxu0 0.0
    %1182 = vmatpush1.xpose.msra.mxu0 0.0
    %1183 = vmatprep.subr.mxu0 0.0
    %1184 = vmatpush1.xpose.msra.mxu0 0.0
    %1185 = vmatprep.subr.mxu0 0.0
    %1186 = vmatpush1.xpose.msra.mxu0 0.0
    %1187 = vmatprep.subr.mxu0 0.0
    %1188 = vmatpush1.xpose.msra.mxu0 0.0
    %1189 = vmatprep.subr.mxu0 0.0
    %1190 = vmatpush1.xpose.msra.mxu0 0.0
    %1191 = vmatprep.subr.mxu0 0.0
    %1192 = vmatpush1.xpose.msra.mxu0 0.0
    %1193 = vmatprep.subr.mxu0 0.0
    %1194 = vmatpush1.xpose.msra.mxu0 0.0
    %1195 = vmatprep.subr.mxu0 0.0
    %1196 = vmatpush1.xpose.msra.mxu0 0.0
    %1197 = vmatprep.subr.mxu0 0.0
    %1198 = vmatpush1.xpose.msra.mxu0 0.0
    %1199 = vmatprep.subr.mxu0 0.0
    %1200 = vmatpush1.xpose.msra.mxu0 0.0
    %1201 = vmatprep.subr.mxu0 0.0
    %1202 = vmatpush1.xpose.msra.mxu0 0.0
    %1203 = vmatprep.subr.mxu0 0.0
    %1204 = vmatpush1.xpose.msra.mxu0 0.0
    %1205 = vmatprep.subr.mxu0 0.0
    %1206 = vmatpush1.xpose.msra.mxu0 0.0
    %1207 = vmatprep.subr.mxu0 0.0
    %1208 = vmatpush1.xpose.msra.mxu0 0.0
    %1209 = vmatprep.subr.mxu0 0.0
    %1210 = vmatpush1.xpose.msra.mxu0 0.0
    %1211 = vmatprep.subr.mxu0 0.0
    %1212 = vmatpush1.xpose.msra.mxu0 0.0
    %1213 = vmatprep.subr.mxu0 0.0
    %1214 = vmatpush1.xpose.msra.mxu0 0.0
    %1215 = vmatprep.mubr.f32.mxu0 0.0
    %1216 = vmatmul.mubr.f32.gmra.mrb[0].mxu0 %v1147
    %v1217 = vpop.f32.mrb[0].mxu0
    %v1218 = vadd.f32 0.0, %v1217
    %v1219 = vpop.f32.mrb[0].mxu0
    %1220 = vdwg.mxu0
    %v1221 = vmul.f32 %v1218, 0.35355338
    %v1222 = vsel %vm134, %v1221, -inf
    %1223 = vmax.xlane.f32.xlu0 %v1222
    %v1224 = vpop.xlane.xlu0 %1223
    %v1225 = vsub.f32 %v1221, %v1224
    %v1226 = vmul.f32 %v1225, 1.442695
    %v1227 = vpow.pop %v1226
    %v1228 = vsel %vm134, %v1227, 0.0
    %1229 = vadd.xlane.f32.xlu0 %v1228
    %v1230 = vpop.xlane.xlu0 %1229
    %v1231 = vrcp.pop %v1230
    %v1232 = vmul.f32 %v1227, %v1231
    %1233 = vrot.lane.b32.xlu0 %v128, 48
    %v1234 = vpop.permute.xlu0 %1233
    %v1237 = vsel %vm134, %v1232, 0
    %1239 = vmatprep.subr.mxu0 0.0
    %1240 = vmatpush1.msra.mxu0 %v1234
    %1241 = vmatprep.subr.mxu0 0.0
    %1242 = vmatpush1.msra.mxu0 0.0
    %1243 = vmatprep.subr.mxu0 0.0
    %1244 = vmatpush1.msra.mxu0 0.0
    %1245 = vmatprep.subr.mxu0 0.0
    %1246 = vmatpush1.msra.mxu0 0.0
    %1247 = vmatprep.subr.mxu0 0.0
    %1248 = vmatpush1.msra.mxu0 0.0
    %1249 = vmatprep.subr.mxu0 0.0
    %1250 = vmatpush1.msra.mxu0 0.0
    %1251 = vmatprep.subr.mxu0 0.0
    %1252 = vmatpush1.msra.mxu0 0.0
    %1253 = vmatprep.subr.mxu0 0.0
    %1254 = vmatpush1.msra.mxu0 0.0
    %1255 = vmatprep.subr.mxu0 0.0
    %1256 = vmatpush1.msra.mxu0 0.0
    %1257 = vmatprep.subr.mxu0 0.0
    %1258 = vmatpush1.msra.mxu0 0.0
    %1259 = vmatprep.subr.mxu0 0.0
    %1260 = vmatpush1.msra.mxu0 0.0
    %1261 = vmatprep.subr.mxu0 0.0
    %1262 = vmatpush1.msra.mxu0 0.0
    %1263 = vmatprep.subr.mxu0 0.0
    %1264 = vmatpush1.msra.mxu0 0.0
    %1265 = vmatprep.subr.mxu0 0.0
    %1266 = vmatpush1.msra.mxu0 0.0
    %1267 = vmatprep.subr.mxu0 0.0
    %1268 = vmatpush1.msra.mxu0 0.0
    %1269 = vmatprep.subr.mxu0 0.0
    %1270 = vmatpush1.msra.mxu0 0.0
    %1271 = vmatprep.subr.mxu0 0.0
    %1272 = vmatpush1.msra.mxu0 0.0
    %1273 = vmatprep.subr.mxu0 0.0
    %1274 = vmatpush1.msra.mxu0 0.0
    %1275 = vmatprep.subr.mxu0 0.0
    %1276 = vmatpush1.msra.mxu0 0.0
    %1277 = vmatprep.subr.mxu0 0.0
    %1278 = vmatpush1.msra.mxu0 0.0
    %1279 = vmatprep.subr.mxu0 0.0
    %1280 = vmatpush1.msra.mxu0 0.0
    %1281 = vmatprep.subr.mxu0 0.0
    %1282 = vmatpush1.msra.mxu0 0.0
    %1283 = vmatprep.subr.mxu0 0.0
    %1284 = vmatpush1.msra.mxu0 0.0
    %1285 = vmatprep.subr.mxu0 0.0
    %1286 = vmatpush1.msra.mxu0 0.0
    %1287 = vmatprep.subr.mxu0 0.0
    %1288 = vmatpush1.msra.mxu0 0.0
    %1289 = vmatprep.subr.mxu0 0.0
    %1290 = vmatpush1.msra.mxu0 0.0
    %1291 = vmatprep.subr.mxu0 0.0
    %1292 = vmatpush1.msra.mxu0 0.0
    %1293 = vmatprep.subr.mxu0 0.0
    %1294 = vmatpush1.msra.mxu0 0.0
    %1295 = vmatprep.subr.mxu0 0.0
    %1296 = vmatpush1.msra.mxu0 0.0
    %1297 = vmatprep.subr.mxu0 0.0
    %1298 = vmatpush1.msra.mxu0 0.0
    %1299 = vmatprep.subr.mxu0 0.0
    %1300 = vmatpush1.msra.mxu0 0.0
    %1301 = vmatprep.subr.mxu0 0.0
    %1302 = vmatpush1.msra.mxu0 0.0
    %1303 = vmatprep.mubr.f32.mxu0 0.0
    %1304 = vmatmul.mubr.f32.gmra.mrb[0].mxu0 %v1237
    %v1305 = vpop.f32.mrb[0].mxu0
    %v1306 = vadd.f32 0.0, %v1305
    %v1307 = vpop.f32.mrb[0].mxu0
    %1308 = vdwg.mxu0
    %1309 = vrot.lane.b32.xlu0 %v128, 104
    %v1310 = vpop.permute.xlu0 %1309
    %1311 = vrot.lane.b32.xlu0 %v128, 72
    %v1312 = vpop.permute.xlu0 %1311
    %v1313 = vsel %vm134, %v1310, 0
    %v1315 = vsel %vm134, %v1312, 0
    %1317 = vmatprep.subr.mxu0 0.0
    %1318 = vmatpush1.xpose.msra.mxu0 %v1315
    %1319 = vmatprep.subr.mxu0 0.0
    %1320 = vmatpush1.xpose.msra.mxu0 0.0
    %1321 = vmatprep.subr.mxu0 0.0
    %1322 = vmatpush1.xpose.msra.mxu0 0.0
    %1323 = vmatprep.subr.mxu0 0.0
    %1324 = vmatpush1.xpose.msra.mxu0 0.0
    %1325 = vmatprep.subr.mxu0 0.0
    %1326 = vmatpush1.xpose.msra.mxu0 0.0
    %1327 = vmatprep.subr.mxu0 0.0
    %1328 = vmatpush1.xpose.msra.mxu0 0.0
    %1329 = vmatprep.subr.mxu0 0.0
    %1330 = vmatpush1.xpose.msra.mxu0 0.0
    %1331 = vmatprep.subr.mxu0 0.0
    %1332 = vmatpush1.xpose.msra.mxu0 0.0
    %1333 = vmatprep.subr.mxu0 0.0
    %1334 = vmatpush1.xpose.msra.mxu0 0.0
    %1335 = vmatprep.subr.mxu0 0.0
    %1336 = vmatpush1.xpose.msra.mxu0 0.0
    %1337 = vmatprep.subr.mxu0 0.0
    %1338 = vmatpush1.xpose.msra.mxu0 0.0
    %1339 = vmatprep.subr.mxu0 0.0
    %1340 = vmatpush1.xpose.msra.mxu0 0.0
    %1341 = vmatprep.subr.mxu0 0.0
    %1342 = vmatpush1.xpose.msra.mxu0 0.0
    %1343 = vmatprep.subr.mxu0 0.0
    %1344 = vmatpush1.xpose.msra.mxu0 0.0
    %1345 = vmatprep.subr.mxu0 0.0
    %1346 = vmatpush1.xpose.msra.mxu0 0.0
    %1347 = vmatprep.subr.mxu0 0.0
    %1348 = vmatpush1.xpose.msra.mxu0 0.0
    %1349 = vmatprep.subr.mxu0 0.0
    %1350 = vmatpush1.xpose.msra.mxu0 0.0
    %1351 = vmatprep.subr.mxu0 0.0
    %1352 = vmatpush1.xpose.msra.mxu0 0.0
    %1353 = vmatprep.subr.mxu0 0.0
    %1354 = vmatpush1.xpose.msra.mxu0 0.0
    %1355 = vmatprep.subr.mxu0 0.0
    %1356 = vmatpush1.xpose.msra.mxu0 0.0
    %1357 = vmatprep.subr.mxu0 0.0
    %1358 = vmatpush1.xpose.msra.mxu0 0.0
    %1359 = vmatprep.subr.mxu0 0.0
    %1360 = vmatpush1.xpose.msra.mxu0 0.0
    %1361 = vmatprep.subr.mxu0 0.0
    %1362 = vmatpush1.xpose.msra.mxu0 0.0
    %1363 = vmatprep.subr.mxu0 0.0
    %1364 = vmatpush1.xpose.msra.mxu0 0.0
    %1365 = vmatprep.subr.mxu0 0.0
    %1366 = vmatpush1.xpose.msra.mxu0 0.0
    %1367 = vmatprep.subr.mxu0 0.0
    %1368 = vmatpush1.xpose.msra.mxu0 0.0
    %1369 = vmatprep.subr.mxu0 0.0
    %1370 = vmatpush1.xpose.msra.mxu0 0.0
    %1371 = vmatprep.subr.mxu0 0.0
    %1372 = vmatpush1.xpose.msra.mxu0 0.0
    %1373 = vmatprep.subr.mxu0 0.0
    %1374 = vmatpush1.xpose.msra.mxu0 0.0
    %1375 = vmatprep.subr.mxu0 0.0
    %1376 = vmatpush1.xpose.msra.mxu0 0.0
    %1377 = vmatprep.subr.mxu0 0.0
    %1378 = vmatpush1.xpose.msra.mxu0 0.0
    %1379 = vmatprep.subr.mxu0 0.0
    %1380 = vmatpush1.xpose.msra.mxu0 0.0
    %1381 = vmatprep.mubr.f32.mxu0 0.0
    %1382 = vmatmul.mubr.f32.gmra.mrb[0].mxu0 %v1313
    %v1383 = vpop.f32.mrb[0].mxu0
    %v1384 = vadd.f32 0.0, %v1383
    %v1385 = vpop.f32.mrb[0].mxu0
    %1386 = vdwg.mxu0
    %v1387 = vmul.f32 %v1384, 0.35355338
    %v1388 = vsel %vm134, %v1387, -inf
    %1389 = vmax.xlane.f32.xlu0 %v1388
    %v1390 = vpop.xlane.xlu0 %1389
    %v1391 = vsub.f32 %v1387, %v1390
    %v1392 = vmul.f32 %v1391, 1.442695
    %v1393 = vpow.pop %v1392
    %v1394 = vsel %vm134, %v1393, 0.0
    %1395 = vadd.xlane.f32.xlu0 %v1394
    %v1396 = vpop.xlane.xlu0 %1395
    %v1397 = vrcp.pop %v1396
    %v1398 = vmul.f32 %v1393, %v1397
    %1399 = vrot.lane.b32.xlu0 %v128, 40
    %v1400 = vpop.permute.xlu0 %1399
    %v1403 = vsel %vm134, %v1398, 0
    %1405 = vmatprep.subr.mxu0 0.0
    %1406 = vmatpush1.msra.mxu0 %v1400
    %1407 = vmatprep.subr.mxu0 0.0
    %1408 = vmatpush1.msra.mxu0 0.0
    %1409 = vmatprep.subr.mxu0 0.0
    %1410 = vmatpush1.msra.mxu0 0.0
    %1411 = vmatprep.subr.mxu0 0.0
    %1412 = vmatpush1.msra.mxu0 0.0
    %1413 = vmatprep.subr.mxu0 0.0
    %1414 = vmatpush1.msra.mxu0 0.0
    %1415 = vmatprep.subr.mxu0 0.0
    %1416 = vmatpush1.msra.mxu0 0.0
    %1417 = vmatprep.subr.mxu0 0.0
    %1418 = vmatpush1.msra.mxu0 0.0
    %1419 = vmatprep.subr.mxu0 0.0
    %1420 = vmatpush1.msra.mxu0 0.0
    %1421 = vmatprep.subr.mxu0 0.0
    %1422 = vmatpush1.msra.mxu0 0.0
    %1423 = vmatprep.subr.mxu0 0.0
    %1424 = vmatpush1.msra.mxu0 0.0
    %1425 = vmatprep.subr.mxu0 0.0
    %1426 = vmatpush1.msra.mxu0 0.0
    %1427 = vmatprep.subr.mxu0 0.0
    %1428 = vmatpush1.msra.mxu0 0.0
    %1429 = vmatprep.subr.mxu0 0.0
    %1430 = vmatpush1.msra.mxu0 0.0
    %1431 = vmatprep.subr.mxu0 0.0
    %1432 = vmatpush1.msra.mxu0 0.0
    %1433 = vmatprep.subr.mxu0 0.0
    %1434 = vmatpush1.msra.mxu0 0.0
    %1435 = vmatprep.subr.mxu0 0.0
    %1436 = vmatpush1.msra.mxu0 0.0
    %1437 = vmatprep.subr.mxu0 0.0
    %1438 = vmatpush1.msra.mxu0 0.0
    %1439 = vmatprep.subr.mxu0 0.0
    %1440 = vmatpush1.msra.mxu0 0.0
    %1441 = vmatprep.subr.mxu0 0.0
    %1442 = vmatpush1.msra.mxu0 0.0
    %1443 = vmatprep.subr.mxu0 0.0
    %1444 = vmatpush1.msra.mxu0 0.0
    %1445 = vmatprep.subr.mxu0 0.0
    %1446 = vmatpush1.msra.mxu0 0.0
    %1447 = vmatprep.subr.mxu0 0.0
    %1448 = vmatpush1.msra.mxu0 0.0
    %1449 = vmatprep.subr.mxu0 0.0
    %1450 = vmatpush1.msra.mxu0 0.0
    %1451 = vmatprep.subr.mxu0 0.0
    %1452 = vmatpush1.msra.mxu0 0.0
    %1453 = vmatprep.subr.mxu0 0.0
    %1454 = vmatpush1.msra.mxu0 0.0
    %1455 = vmatprep.subr.mxu0 0.0
    %1456 = vmatpush1.msra.mxu0 0.0
    %1457 = vmatprep.subr.mxu0 0.0
    %1458 = vmatpush1.msra.mxu0 0.0
    %1459 = vmatprep.subr.mxu0 0.0
    %1460 = vmatpush1.msra.mxu0 0.0
    %1461 = vmatprep.subr.mxu0 0.0
    %1462 = vmatpush1.msra.mxu0 0.0
    %1463 = vmatprep.subr.mxu0 0.0
    %1464 = vmatpush1.msra.mxu0 0.0
    %1465 = vmatprep.subr.mxu0 0.0
    %1466 = vmatpush1.msra.mxu0 0.0
    %1467 = vmatprep.subr.mxu0 0.0
    %1468 = vmatpush1.msra.mxu0 0.0
    %1469 = vmatprep.mubr.f32.mxu0 0.0
    %1470 = vmatmul.mubr.f32.gmra.mrb[0].mxu0 %v1403
    %v1471 = vpop.f32.mrb[0].mxu0
    %v1472 = vadd.f32 0.0, %v1471
    %v1473 = vpop.f32.mrb[0].mxu0
    %1474 = vdwg.mxu0
    %1476 = vrot.lane.b32.xlu0 %v1140, 8
    %v1477 = vpop.permute.xlu0 %1476
    %1480 = vrot.lane.b32.xlu0 %v1306, 16
    %v1481 = vpop.permute.xlu0 %1480
    %1484 = vrot.lane.b32.xlu0 %v1472, 24
    %v1485 = vpop.permute.xlu0 %1484
    %v1487 = vsel %vm134, %v974, %v1477
    %v1488 = vsel %vm808, %v1487, %v1481
    %v1489 = vsel %vm810, %v1488, %v1485
    %v1490 = vld [vmem:[%s2] sm:$0xff]
    %v1491 = vld [vmem:[%s2 + $0x8] sm:$0xff]
    %v1492 = vld [vmem:[%s2 + $0x10] sm:$0xff]
    %v1493 = vld [vmem:[%s2 + $0x18] sm:$0xff]
    %v1494 = vlaneseq
    %v1495 = vshrl.u32 %v1494, 7
    %v1496 = vsub.s32 1, %v1495
    %v1497 = vrot.slane %v40, %v1496
    %v1499 = vsel %vm49, %v811, 0
    %v1502 = vsel %vm49, %v1489, 0
    %1504 = vmatprep.subr.mxu0 0.0
    %1505 = vmatpush1.msra.mxu0 %v1490
    %1506 = vmatprep.subr.mxu0 0.0
    %1507 = vmatpush1.msra.mxu0 %v1491
    %1508 = vmatprep.subr.mxu0 0.0
    %1509 = vmatpush1.msra.mxu0 %v1492
    %1510 = vmatprep.subr.mxu0 0.0
    %1511 = vmatpush1.msra.mxu0 %v1493
    %1512 = vmatprep.subr.mxu0 0.0
    %1513 = vmatpush1.msra.mxu0 0.0
    %1514 = vmatprep.subr.mxu0 0.0
    %1515 = vmatpush1.msra.mxu0 0.0
    %1516 = vmatprep.subr.mxu0 0.0
    %1517 = vmatpush1.msra.mxu0 0.0
    %1518 = vmatprep.subr.mxu0 0.0
    %1519 = vmatpush1.msra.mxu0 0.0
    %1520 = vmatprep.subr.mxu0 0.0
    %1521 = vmatpush1.msra.mxu0 0.0
    %1522 = vmatprep.subr.mxu0 0.0
    %1523 = vmatpush1.msra.mxu0 0.0
    %1524 = vmatprep.subr.mxu0 0.0
    %1525 = vmatpush1.msra.mxu0 0.0
    %1526 = vmatprep.subr.mxu0 0.0
    %1527 = vmatpush1.msra.mxu0 0.0
    %1528 = vmatprep.subr.mxu0 0.0
    %1529 = vmatpush1.msra.mxu0 0.0
    %1530 = vmatprep.subr.mxu0 0.0
    %1531 = vmatpush1.msra.mxu0 0.0
    %1532 = vmatprep.subr.mxu0 0.0
    %1533 = vmatpush1.msra.mxu0 0.0
    %1534 = vmatprep.subr.mxu0 0.0
    %1535 = vmatpush1.msra.mxu0 0.0
    %1536 = vmatprep.subr.mxu0 0.0
    %1537 = vmatpush1.msra.mxu0 0.0
    %1538 = vmatprep.subr.mxu0 0.0
    %1539 = vmatpush1.msra.mxu0 0.0
    %1540 = vmatprep.subr.mxu0 0.0
    %1541 = vmatpush1.msra.mxu0 0.0
    %1542 = vmatprep.subr.mxu0 0.0
    %1543 = vmatpush1.msra.mxu0 0.0
    %1544 = vmatprep.subr.mxu0 0.0
    %1545 = vmatpush1.msra.mxu0 0.0
    %1546 = vmatprep.subr.mxu0 0.0
    %1547 = vmatpush1.msra.mxu0 0.0
    %1548 = vmatprep.subr.mxu0 0.0
    %1549 = vmatpush1.msra.mxu0 0.0
    %1550 = vmatprep.subr.mxu0 0.0
    %1551 = vmatpush1.msra.mxu0 0.0
    %1552 = vmatprep.subr.mxu0 0.0
    %1553 = vmatpush1.msra.mxu0 0.0
    %1554 = vmatprep.subr.mxu0 0.0
    %1555 = vmatpush1.msra.mxu0 0.0
    %1556 = vmatprep.subr.mxu0 0.0
    %1557 = vmatpush1.msra.mxu0 0.0
    %1558 = vmatprep.subr.mxu0 0.0
    %1559 = vmatpush1.msra.mxu0 0.0
    %1560 = vmatprep.subr.mxu0 0.0
    %1561 = vmatpush1.msra.mxu0 0.0
    %1562 = vmatprep.subr.mxu0 0.0
    %1563 = vmatpush1.msra.mxu0 0.0
    %1564 = vmatprep.subr.mxu0 0.0
    %1565 = vmatpush1.msra.mxu0 0.0
    %1566 = vmatprep.subr.mxu0 0.0
    %1567 = vmatpush1.msra.mxu0 0.0
    %1568 = vmatprep.mubr.f32.mxu0 0.0
    %1569 = vmatmul.mubr.f32.gmra.mrb[0].mxu0 %v1499
    %v1570 = vpop.f32.mrb[0].mxu0
    %v1571 = vadd.f32 %v1497, %v1570
    %v1572 = vpop.f32.mrb[0].mxu0
    %1573 = vmatprep.mubr.f32.mxu0 0.0
    %1574 = vmatmul.mubr.f32.gmra.mrb[0].mxu0 %v1502
    %v1575 = vpop.f32.mrb[0].mxu0
    %v1576 = vadd.f32 %v1497, %v1575
    %v1577 = vpop.f32.mrb[0].mxu0
    %1578 = vdwg.mxu0
    %v1579 = vadd.f32 %v38, %v1571
    %v1580 = vadd.f32 %v39, %v1576
    %v1581 = vsel %vm49, %v1579, 0.0
    %1582 = vadd.xlane.f32.xlu0 %v1581
    %v1583 = vpop.xlane.xlu0 %1582
    %v1584 = vsel %vm49, %v1580, 0.0
    %1585 = vadd.xlane.f32.xlu0 %v1584
    %v1586 = vpop.xlane.xlu0 %1585
    %v1587 = vrcp.pop 32.0
    %v1588 = vmul.f32 %v1583, %v1587
    %v1589 = vmul.f32 %v1586, %v1587
    %v1590 = vmul.f32 %v1579, %v1579
    %v1591 = vmul.f32 %v1580, %v1580
    %v1592 = vsel %vm49, %v1590, 0.0
    %1593 = vadd.xlane.f32.xlu0 %v1592
    %v1594 = vpop.xlane.xlu0 %1593
    %v1595 = vsel %vm49, %v1591, 0.0
    %1596 = vadd.xlane.f32.xlu0 %v1595
    %v1597 = vpop.xlane.xlu0 %1596
    %v1598 = vmul.f32 %v1594, %v1587
    %v1599 = vmul.f32 %v1597, %v1587
    %v1600 = vmul.f32 %v1588, %v1588
    %v1601 = vmul.f32 %v1589, %v1589
    %v1602 = vsub.f32 %v1598, %v1600
    %v1603 = vsub.f32 %v1599, %v1601
    %v1604 = vsub.f32 %v1579, %v1588
    %v1605 = vsub.f32 %v1580, %v1589
    %v1606 = vadd.f32 %v1602, 1e-05
    %v1607 = vadd.f32 %v1603, 1e-05
    %v1608 = vrsqrt.pop %v1606
    %v1609 = vrsqrt.pop %v1607
    %v1610 = vmul.f32 %v1604, %v1608
    %v1611 = vmul.f32 %v1605, %v1609
    %v1612 = vlaneseq
    %v1613 = vshrl.u32 %v1612, 7
    %v1614 = vsub.s32 2, %v1613
    %v1615 = vrot.slane %v40, %v1614
    %v1616 = vmul.f32 %v1610, %v1615
    %v1617 = vmul.f32 %v1611, %v1615
    %v1618 = vlaneseq
    %v1619 = vshrl.u32 %v1618, 7
    %v1620 = vsub.s32 3, %v1619
    %v1621 = vrot.slane %v40, %v1620
    %v1622 = vadd.f32 %v1616, %v1621
    %v1623 = vadd.f32 %v1617, %v1621
    %v1624 = vld [vmem:[%s3] sm:$0xff]
    %v1625 = vld [vmem:[%s3 + $0x8] sm:$0xff]
    %v1626 = vld [vmem:[%s3 + $0x10] sm:$0xff]
    %v1627 = vld [vmem:[%s3 + $0x18] sm:$0xff]
    %v1628 = vlaneseq
    %v1629 = vshrl.u32 %v1628, 7
    %v1630 = vsub.s32 4, %v1629
    %v1631 = vrot.slane %v40, %v1630
    %v1633 = vsel %vm49, %v1622, 0
    %v1636 = vsel %vm49, %v1623, 0
    %1638 = vmatprep.subr.mxu0 0.0
    %1639 = vmatpush1.msra.mxu0 %v1624
    %1640 = vmatprep.subr.mxu0 0.0
    %1641 = vmatpush1.msra.mxu0 %v1625
    %1642 = vmatprep.subr.mxu0 0.0
    %1643 = vmatpush1.msra.mxu0 %v1626
    %1644 = vmatprep.subr.mxu0 0.0
    %1645 = vmatpush1.msra.mxu0 %v1627
    %1646 = vmatprep.subr.mxu0 0.0
    %1647 = vmatpush1.msra.mxu0 0.0
    %1648 = vmatprep.subr.mxu0 0.0
    %1649 = vmatpush1.msra.mxu0 0.0
    %1650 = vmatprep.subr.mxu0 0.0
    %1651 = vmatpush1.msra.mxu0 0.0
    %1652 = vmatprep.subr.mxu0 0.0
    %1653 = vmatpush1.msra.mxu0 0.0
    %1654 = vmatprep.subr.mxu0 0.0
    %1655 = vmatpush1.msra.mxu0 0.0
    %1656 = vmatprep.subr.mxu0 0.0
    %1657 = vmatpush1.msra.mxu0 0.0
    %1658 = vmatprep.subr.mxu0 0.0
    %1659 = vmatpush1.msra.mxu0 0.0
    %1660 = vmatprep.subr.mxu0 0.0
    %1661 = vmatpush1.msra.mxu0 0.0
    %1662 = vmatprep.subr.mxu0 0.0
    %1663 = vmatpush1.msra.mxu0 0.0
    %1664 = vmatprep.subr.mxu0 0.0
    %1665 = vmatpush1.msra.mxu0 0.0
    %1666 = vmatprep.subr.mxu0 0.0
    %1667 = vmatpush1.msra.mxu0 0.0
    %1668 = vmatprep.subr.mxu0 0.0
    %1669 = vmatpush1.msra.mxu0 0.0
    %1670 = vmatprep.subr.mxu0 0.0
    %1671 = vmatpush1.msra.mxu0 0.0
    %1672 = vmatprep.subr.mxu0 0.0
    %1673 = vmatpush1.msra.mxu0 0.0
    %1674 = vmatprep.subr.mxu0 0.0
    %1675 = vmatpush1.msra.mxu0 0.0
    %1676 = vmatprep.subr.mxu0 0.0
    %1677 = vmatpush1.msra.mxu0 0.0
    %1678 = vmatprep.subr.mxu0 0.0
    %1679 = vmatpush1.msra.mxu0 0.0
    %1680 = vmatprep.subr.mxu0 0.0
    %1681 = vmatpush1.msra.mxu0 0.0
    %1682 = vmatprep.subr.mxu0 0.0
    %1683 = vmatpush1.msra.mxu0 0.0
    %1684 = vmatprep.subr.mxu0 0.0
    %1685 = vmatpush1.msra.mxu0 0.0
    %1686 = vmatprep.subr.mxu0 0.0
    %1687 = vmatpush1.msra.mxu0 0.0
    %1688 = vmatprep.subr.mxu0 0.0
    %1689 = vmatpush1.msra.mxu0 0.0
    %1690 = vmatprep.subr.mxu0 0.0
    %1691 = vmatpush1.msra.mxu0 0.0
    %1692 = vmatprep.subr.mxu0 0.0
    %1693 = vmatpush1.msra.mxu0 0.0
    %1694 = vmatprep.subr.mxu0 0.0
    %1695 = vmatpush1.msra.mxu0 0.0
    %1696 = vmatprep.subr.mxu0 0.0
    %1697 = vmatpush1.msra.mxu0 0.0
    %1698 = vmatprep.subr.mxu0 0.0
    %1699 = vmatpush1.msra.mxu0 0.0
    %1700 = vmatprep.subr.mxu0 0.0
    %1701 = vmatpush1.msra.mxu0 0.0
    %1702 = vmatprep.mubr.f32.mxu0 0.0
    %1703 = vmatmul.mubr.f32.gmra.mrb[0].mxu0 %v1633
    %v1704 = vpop.f32.mrb[0].mxu0
    %v1705 = vadd.f32 %v1631, %v1704
    %v1706 = vpop.f32.mrb[0].mxu0
    %1707 = vmatprep.mubr.f32.mxu0 0.0
    %1708 = vmatmul.mubr.f32.gmra.mrb[0].mxu0 %v1636
    %v1709 = vpop.f32.mrb[0].mxu0
    %v1710 = vadd.f32 %v1631, %v1709
    %v1711 = vpop.f32.mrb[0].mxu0
    %1712 = vdwg.mxu0
    %v1713 = vmax.f32 %v1705, 0.0
    %v1714 = vmax.f32 %v1710, 0.0
    %v1715 = vld [vmem:[%s4] sm:$0xff]
    %v1716 = vld [vmem:[%s4 + $0x8] sm:$0xff]
    %v1717 = vld [vmem:[%s4 + $0x10] sm:$0xff]
    %v1718 = vld [vmem:[%s4 + $0x18] sm:$0xff]
    %v1719 = vld [vmem:[%s4 + $0x20] sm:$0xff]
    %v1720 = vld [vmem:[%s4 + $0x28] sm:$0xff]
    %v1721 = vld [vmem:[%s4 + $0x30] sm:$0xff]
    %v1722 = vld [vmem:[%s4 + $0x38] sm:$0xff]
    %v1723 = vlaneseq
    %v1724 = vshrl.u32 %v1723, 7
    %v1725 = vsub.s32 5, %v1724
    %v1726 = vrot.slane %v40, %v1725
    %vm1727 = vcmask 523264
    %v1729 = vsel %vm1727, %v1713, 0
    %v1732 = vsel %vm1727, %v1714, 0
    %1734 = vmatprep.subr.mxu0 0.0
    %1735 = vmatpush1.msra.mxu0 %v1715
    %1736 = vmatprep.subr.mxu0 0.0
    %1737 = vmatpush1.msra.mxu0 %v1716
    %1738 = vmatprep.subr.mxu0 0.0
    %1739 = vmatpush1.msra.mxu0 %v1717
    %1740 = vmatprep.subr.mxu0 0.0
    %1741 = vmatpush1.msra.mxu0 %v1718
    %1742 = vmatprep.subr.mxu0 0.0
    %1743 = vmatpush1.msra.mxu0 %v1719
    %1744 = vmatprep.subr.mxu0 0.0
    %1745 = vmatpush1.msra.mxu0 %v1720
    %1746 = vmatprep.subr.mxu0 0.0
    %1747 = vmatpush1.msra.mxu0 %v1721
    %1748 = vmatprep.subr.mxu0 0.0
    %1749 = vmatpush1.msra.mxu0 %v1722
    %1750 = vmatprep.subr.mxu0 0.0
    %1751 = vmatpush1.msra.mxu0 0.0
    %1752 = vmatprep.subr.mxu0 0.0
    %1753 = vmatpush1.msra.mxu0 0.0
    %1754 = vmatprep.subr.mxu0 0.0
    %1755 = vmatpush1.msra.mxu0 0.0
    %1756 = vmatprep.subr.mxu0 0.0
    %1757 = vmatpush1.msra.mxu0 0.0
    %1758 = vmatprep.subr.mxu0 0.0
    %1759 = vmatpush1.msra.mxu0 0.0
    %1760 = vmatprep.subr.mxu0 0.0
    %1761 = vmatpush1.msra.mxu0 0.0
    %1762 = vmatprep.subr.mxu0 0.0
    %1763 = vmatpush1.msra.mxu0 0.0
    %1764 = vmatprep.subr.mxu0 0.0
    %1765 = vmatpush1.msra.mxu0 0.0
    %1766 = vmatprep.subr.mxu0 0.0
    %1767 = vmatpush1.msra.mxu0 0.0
    %1768 = vmatprep.subr.mxu0 0.0
    %1769 = vmatpush1.msra.mxu0 0.0
    %1770 = vmatprep.subr.mxu0 0.0
    %1771 = vmatpush1.msra.mxu0 0.0
    %1772 = vmatprep.subr.mxu0 0.0
    %1773 = vmatpush1.msra.mxu0 0.0
    %1774 = vmatprep.subr.mxu0 0.0
    %1775 = vmatpush1.msra.mxu0 0.0
    %1776 = vmatprep.subr.mxu0 0.0
    %1777 = vmatpush1.msra.mxu0 0.0
    %1778 = vmatprep.subr.mxu0 0.0
    %1779 = vmatpush1.msra.mxu0 0.0
    %1780 = vmatprep.subr.mxu0 0.0
    %1781 = vmatpush1.msra.mxu0 0.0
    %1782 = vmatprep.subr.mxu0 0.0
    %1783 = vmatpush1.msra.mxu0 0.0
    %1784 = vmatprep.subr.mxu0 0.0
    %1785 = vmatpush1.msra.mxu0 0.0
    %1786 = vmatprep.subr.mxu0 0.0
    %1787 = vmatpush1.msra.mxu0 0.0
    %1788 = vmatprep.subr.mxu0 0.0
    %1789 = vmatpush1.msra.mxu0 0.0
    %1790 = vmatprep.subr.mxu0 0.0
    %1791 = vmatpush1.msra.mxu0 0.0
    %1792 = vmatprep.subr.mxu0 0.0
    %1793 = vmatpush1.msra.mxu0 0.0
    %1794 = vmatprep.subr.mxu0 0.0
    %1795 = vmatpush1.msra.mxu0 0.0
    %1796 = vmatprep.subr.mxu0 0.0
    %1797 = vmatpush1.msra.mxu0 0.0
    %1798 = vmatprep.mubr.f32.mxu0 0.0
    %1799 = vmatmul.mubr.f32.gmra.mrb[0].mxu0 %v1729
    %v1800 = vpop.f32.mrb[0].mxu0
    %v1801 = vadd.f32 %v1726, %v1800
    %v1802 = vpop.f32.mrb[0].mxu0
    %1803 = vmatprep.mubr.f32.mxu0 0.0
    %1804 = vmatmul.mubr.f32.gmra.mrb[0].mxu0 %v1732
    %v1805 = vpop.f32.mrb[0].mxu0
    %v1806 = vadd.f32 %v1726, %v1805
    %v1807 = vpop.f32.mrb[0].mxu0
    %1808 = vdwg.mxu0
    %v1809 = vadd.f32 %v1622, %v1801
    %v1810 = vadd.f32 %v1623, %v1806
    %v1811 = vsel %vm49, %v1809, 0.0
    %1812 = vadd.xlane.f32.xlu0 %v1811
    %v1813 = vpop.xlane.xlu0 %1812
    %v1814 = vsel %vm49, %v1810, 0.0
    %1815 = vadd.xlane.f32.xlu0 %v1814
    %v1816 = vpop.xlane.xlu0 %1815
    %v1817 = vmul.f32 %v1813, %v1587
    %v1818 = vmul.f32 %v1816, %v1587
    %v1819 = vmul.f32 %v1809, %v1809
    %v1820 = vmul.f32 %v1810, %v1810
    %v1821 = vsel %vm49, %v1819, 0.0
    %1822 = vadd.xlane.f32.xlu0 %v1821
    %v1823 = vpop.xlane.xlu0 %1822
    %v1824 = vsel %vm49, %v1820, 0.0
    %1825 = vadd.xlane.f32.xlu0 %v1824
    %v1826 = vpop.xlane.xlu0 %1825
    %v1827 = vmul.f32 %v1823, %v1587
    %v1828 = vmul.f32 %v1826, %v1587
    %v1829 = vmul.f32 %v1817, %v1817
    %v1830 = vmul.f32 %v1818, %v1818
    %v1831 = vsub.f32 %v1827, %v1829
    %v1832 = vsub.f32 %v1828, %v1830
    %v1833 = vsub.f32 %v1809, %v1817
    %v1834 = vsub.f32 %v1810, %v1818
    %v1835 = vadd.f32 %v1831, 1e-05
    %v1836 = vadd.f32 %v1832, 1e-05
    %v1837 = vrsqrt.pop %v1835
    %v1838 = vrsqrt.pop %v1836
    %v1839 = vmul.f32 %v1833, %v1837
    %v1840 = vmul.f32 %v1834, %v1838
    %v1841 = vlaneseq
    %v1842 = vshrl.u32 %v1841, 7
    %v1843 = vsub.s32 6, %v1842
    %v1844 = vrot.slane %v40, %v1843
    %v1845 = vmul.f32 %v1839, %v1844
    %v1846 = vmul.f32 %v1840, %v1844
    %v1847 = vlaneseq
    %v1848 = vshrl.u32 %v1847, 7
    %v1849 = vsub.s32 7, %v1848
    %v1850 = vrot.slane %v40, %v1849
    %v1851 = vadd.f32 %v1845, %v1850
    %v1852 = vadd.f32 %v1846, %v1850
    %1853 = vst.msk [vmem:[#allocation5] sm:$0xff] %vm49, %v1851
    %1854 = vst.msk [vmem:[#allocation5 + $0x8] sm:$0xff] %vm49, %v1852
    // Predicated region
    $region30: #{encoder_layer.1} parent=1 // pred_check
      _
    $region31: #{encoder_layer.1} parent=1 // pred_check_branch
      %1856 = sbr.rel (0) target = $region33
    $region32: #{encoder_layer.1} parent=1 // pred_region
      %s1858 = ssub.s32 256, 256
      %1859 = vsyncadd [#allocation4], %s1858
      %s1860 = sshll.u32 [#allocation5], 4
      %s1861 = int_to_ptr.vmem [resolvable:$true] %s1860
      %1866 = dma.vmem_to_hbm [thread:$0]  %s1861, 256, %s6, [#allocation4], 128, 128, 8
    $region33: #{encoder_layer.1} parent=1 // pred_fallthru
      _
    // Predicated region
    $region34: #{encoder_layer.1} parent=1 // pred_check
      _
    $region35: #{encoder_layer.1} parent=1 // pred_check_branch
      %1868 = sbr.rel (0) target = $region37
    $region36: #{encoder_layer.1} parent=1 // pred_region
      %1869 = dma.done [#allocation4], 256
    $region37: #{encoder_layer.1} parent=1 // pred_fallthru
      _
    %1870 = vsyncpa [#allocation3], 1
    %1871 = vsyncpa [#allocation4], 1

</llo_original>
